<compile_context>
chip_gen: v5e
topology: v5e:2x2
jax: 0.10.0
libtpu: 0.0.40
codegen_flags: <defaults>
</compile_context>

<pallas_src>
import functools

import jax
import jax.numpy as jnp
from jax.experimental import pallas as pl
from jax.experimental.pallas import tpu as pltpu

# ---- module hyperparameters (from the PyTorch source) -----------------------
BLOCK_SIZE = 8               # max sequence length (tril buffer size)
EMBED = 128                  # embedding_count
HEADS = 2                    # head_count / num_heads
HEAD_SIZE = EMBED // HEADS   # 64
SCALE = HEADS ** (-0.5)      # PyTorch code scales by head_count**-0.5
NEG_INF = -1e30              # large finite negative (safer than -inf in masks)


def _mha_kernel(x_ref, wqkv_ref, wp_ref, bp_ref, bias_ref, o_ref, attn_scr, *,
                heads, head_size):
    """One grid step processes a slab of (batch_block * seq_len) token rows.

    x_ref    : (N, C)   bf16   flattened (batch_block, T, C) rows, N = BB*T
    wqkv_ref : (C, 3*H*Dh) bf16  [Wq*SCALE | Wk | Wv] packed along the out dim
    wp_ref   : (H*Dh, C) bf16  output projection (already transposed)
    bp_ref   : (1, C)    f32   output projection bias
    bias_ref : (N, N)    f32   additive block-diagonal causal mask (0 / -1e30)
    o_ref    : (N, C)    f32
    attn_scr : (N, H*Dh) bf16  scratch holding the concatenated head outputs
    """
    hd = heads * head_size

    # Fused QKV projection: one (N, C) @ (C, 3*H*Dh) bf16 MXU pass, f32 acc.
    qkv = jnp.dot(x_ref[...], wqkv_ref[...],
                  preferred_element_type=jnp.float32)          # (N, 3*H*Dh) f32

    bias = bias_ref[...]                                       # (N, N) f32

    for h in range(heads):                                     # small & static
        q = qkv[:, h * head_size:(h + 1) * head_size].astype(jnp.bfloat16)
        k = qkv[:, hd + h * head_size: hd + (h + 1) * head_size].astype(jnp.bfloat16)
        v = qkv[:, 2 * hd + h * head_size: 2 * hd + (h + 1) * head_size].astype(jnp.bfloat16)

        # Scores over the whole slab; cross-batch / non-causal entries are
        # knocked out by the precomputed additive bias.
        s = jnp.dot(q, k.T, preferred_element_type=jnp.float32) + bias  # (N,N)
        m = jnp.max(s, axis=-1, keepdims=True)
        p = jnp.exp(s - m)
        p = p * pl.reciprocal(jnp.sum(p, axis=-1, keepdims=True), approx=True)

        attn = jnp.dot(p.astype(jnp.bfloat16), v,
                       preferred_element_type=jnp.float32)     # (N, Dh) f32

        # Write this head's output into its 64-lane half of the scratch slab
        # (static ref slice -> masked stores, no cross-lane concat shuffle).
        attn_scr[:, h * head_size:(h + 1) * head_size] = attn.astype(jnp.bfloat16)

    # Single K=128 output-projection matmul over the concatenated heads.
    acc = jnp.dot(attn_scr[...], wp_ref[...],
                  preferred_element_type=jnp.float32)          # (N, C) f32
    acc = acc + bp_ref[...]                                    # (1, C) broadcasts
    o_ref[...] = acc.astype(o_ref.dtype)


def multi_head_attention(x, wq, wk, wv, wp, bp, *, batch_block=16):
    """x: (B, T, C).  wq/wk/wv: (C, H*Dh) (already transposed), wp: (H*Dh, C),
    bp: (C,).  batch_block batch elements are folded into each grid step
    (tuning knob; sweep {8, 16, 32} per TPU generation)."""
    B, T, C = x.shape
    H, Dh = HEADS, HEAD_SIZE
    assert C == EMBED and T <= BLOCK_SIZE

    bb = min(batch_block, B)
    num_blocks = pl.cdiv(B, bb)
    b_pad = num_blocks * bb
    if b_pad != B:   # zero-pad so blocks divide evenly (padded rows discarded)
        x = jnp.concatenate([x, jnp.zeros((b_pad - B, T, C), x.dtype)], axis=0)

    rows_per_block = bb * T                       # e.g. 16*8 = 128 token rows
    x_rows = x.reshape(b_pad * T, C).astype(jnp.bfloat16)

    # Fuse the three head projections into one (C, 3*H*Dh) weight, fold the
    # (nonstandard, per the PyTorch source) head_count**-0.5 scale into Wq in
    # f32, then cast to bf16 for the MXU.
    wqkv = jnp.concatenate(
        [wq.astype(jnp.float32) * SCALE, wk.astype(jnp.float32),
         wv.astype(jnp.float32)], axis=1).astype(jnp.bfloat16)
    wp_b = wp.astype(jnp.bfloat16)
    bp2 = bp.reshape(1, C).astype(jnp.float32)

    # Block-diagonal causal mask as an additive f32 bias, computed once in the
    # wrapper: token r attends to c iff same batch element (r//T == c//T) and
    # causal (r%T >= c%T).  Constant block index -> stays resident in VMEM.
    r = jnp.arange(rows_per_block)
    keep = jnp.logical_and(r[:, None] // T == r[None, :] // T,
                           r[:, None] % T >= r[None, :] % T)
    bias = jnp.where(keep, 0.0, NEG_INF).astype(jnp.float32)

    kernel = functools.partial(_mha_kernel, heads=H, head_size=Dh)

    out_rows = pl.pallas_call(
        kernel,
        out_shape=jax.ShapeDtypeStruct((b_pad * T, C), jnp.float32),
        grid_spec=pltpu.PrefetchScalarGridSpec(
            num_scalar_prefetch=0,
            grid=(num_blocks,),
            in_specs=[
                pl.BlockSpec((rows_per_block, C), lambda g: (g, 0)),   # x rows
                pl.BlockSpec((C, 3 * H * Dh), lambda g: (0, 0)),       # Wqkv
                pl.BlockSpec((H * Dh, C), lambda g: (0, 0)),           # Wp
                pl.BlockSpec((1, C), lambda g: (0, 0)),                # bp
                pl.BlockSpec((rows_per_block, rows_per_block),
                             lambda g: (0, 0)),                        # mask bias
            ],
            out_specs=pl.BlockSpec((rows_per_block, C), lambda g: (g, 0)),
            scratch_shapes=[pltpu.VMEM((rows_per_block, H * Dh), jnp.bfloat16)],
        ),
        compiler_params=pltpu.CompilerParams(
            dimension_semantics=("parallel",)),
    )(x_rows, wqkv, wp_b, bp2, bias)

    return out_rows.reshape(b_pad, T, C)[:B].astype(x.dtype)


def reference(x, wq, wk, wv, wp, bp):
    """Pure-JAX f32 reference mirroring the PyTorch forward (eval mode)."""
    B, T, C = x.shape
    q = x @ wq    # (B, T, H*Dh)
    k = x @ wk
    v = x @ wv
    mask = jnp.tril(jnp.ones((T, T), dtype=bool))
    outs = []
    for h in range(HEADS):
        sl = slice(h * HEAD_SIZE, (h + 1) * HEAD_SIZE)
        w = jnp.einsum("btd,bsd->bts", q[..., sl], k[..., sl]) * SCALE
        w = jnp.where(mask, w, -jnp.inf)
        w = jax.nn.softmax(w, axis=-1)
        outs.append(jnp.einsum("bts,bsd->btd", w, v[..., sl]))
    out = jnp.concatenate(outs, axis=-1)
    return out @ wp + bp


if __name__ == "__main__":
    key = jax.random.PRNGKey(0)
    kx, kq, kk, kv, kp, kb = jax.random.split(key, 6)

    # T and C are fixed by the module; batch chosen so the default bb=16 gives
    # a grid of 4 programs (>=2 per v7x TensorCore -> intra-core pipelining).
    B, T, C = 64, BLOCK_SIZE, EMBED

    x = jax.random.normal(kx, (B, T, C), dtype=jnp.float32)

    # Deterministic parameter init.  PyTorch Linear stores (out, in); here we
    # keep the already-transposed (in, out) layouts the kernel consumes.
    wq = jax.random.normal(kq, (C, HEADS * HEAD_SIZE), dtype=jnp.float32) * 0.05
    wk = jax.random.normal(kk, (C, HEADS * HEAD_SIZE), dtype=jnp.float32) * 0.05
    wv = jax.random.normal(kv, (C, HEADS * HEAD_SIZE), dtype=jnp.float32) * 0.05
    wp = jax.random.normal(kp, (HEADS * HEAD_SIZE, C), dtype=jnp.float32) * 0.05
    bp = jax.random.normal(kb, (C,), dtype=jnp.float32) * 0.05

    y = multi_head_attention(x, wq, wk, wv, wp, bp)
    y = jax.block_until_ready(y)

    # Parity vs the f32 reference: the kernel runs its matmuls in bf16 (with
    # f32 accumulation) and uses the EUP approximate reciprocal, so the check
    # uses a bf16-appropriate tolerance instead of the strict f32 1e-4.
    y_ref = reference(x, wq, wk, wv, wp, bp)
    assert y.shape == (B, T, C)
    assert jnp.allclose(y, y_ref, atol=5e-2, rtol=5e-2), (
        float(jnp.max(jnp.abs(y - y_ref))))

    print("KERNEL_OK")
</pallas_src>

<mosaic_0001>
module attributes {stable_mosaic.version = 11 : i64} {
  func.func @_mha_kernel(%arg0: i32, %arg1: memref<128x128xbf16, #tpu.memory_space<vmem>>, %arg2: memref<128x384xbf16, #tpu.memory_space<vmem>>, %arg3: memref<128x128xbf16, #tpu.memory_space<vmem>>, %arg4: memref<1x128xf32, #tpu.memory_space<vmem>>, %arg5: memref<128x128xf32, #tpu.memory_space<vmem>>, %arg6: memref<128x128xf32, #tpu.memory_space<vmem>>, %arg7: memref<128x128xbf16, #tpu.memory_space<vmem>>) attributes {dimension_semantics = [#tpu.dimension_semantics<parallel>], iteration_bounds = array<i64: 4>, scalar_prefetch = 0 : i64, scratch_operands = 1 : i64, tpu.core_type = #tpu.core_type<tc>, window_params = [{transform_indices = @transform_0, window_bounds = array<i64: 128, 128>}, {pipeline_mode = #tpu.pipeline_mode<synchronous>, transform_indices = @transform_1, window_bounds = array<i64: 128, 384>}, {pipeline_mode = #tpu.pipeline_mode<synchronous>, transform_indices = @transform_2, window_bounds = array<i64: 128, 128>}, {pipeline_mode = #tpu.pipeline_mode<synchronous>, transform_indices = @transform_3, window_bounds = array<i64: 1, 128>}, {pipeline_mode = #tpu.pipeline_mode<synchronous>, transform_indices = @transform_4, window_bounds = array<i64: 128, 128>}, {transform_indices = @transform_5, window_bounds = array<i64: 128, 128>}]} {
    %c0 = arith.constant 0 : index
    %c0_0 = arith.constant 0 : index
    %0 = vector.load %arg1[%c0, %c0_0] : memref<128x128xbf16, #tpu.memory_space<vmem>>, vector<128x128xbf16>
    %c0_1 = arith.constant 0 : index
    %c0_2 = arith.constant 0 : index
    %1 = vector.load %arg2[%c0_1, %c0_2] : memref<128x384xbf16, #tpu.memory_space<vmem>>, vector<128x384xbf16>
    %cst = arith.constant dense<0.000000e+00> : vector<128x384xf32>
    %2 = tpu.matmul %0, %1, %cst {dimension_numbers = #tpu.dot_dimension_numbers<[1], [0], [0], [1], [0, 0, 1, 1], [], []>} : vector<128x128xbf16>, vector<128x384xbf16>, vector<128x384xf32> -> vector<128x384xf32>
    %c0_3 = arith.constant 0 : index
    %c0_4 = arith.constant 0 : index
    %3 = vector.load %arg5[%c0_3, %c0_4] : memref<128x128xf32, #tpu.memory_space<vmem>>, vector<128x128xf32>
    %4 = vector.extract_strided_slice %2 {offsets = [0, 0], sizes = [128, 64], strides = [1, 1]} : vector<128x384xf32> to vector<128x64xf32>
    %5 = arith.truncf %4 : vector<128x64xf32> to vector<128x64xbf16>
    %6 = vector.extract_strided_slice %2 {offsets = [0, 128], sizes = [128, 64], strides = [1, 1]} : vector<128x384xf32> to vector<128x64xf32>
    %7 = arith.truncf %6 : vector<128x64xf32> to vector<128x64xbf16>
    %8 = vector.extract_strided_slice %2 {offsets = [0, 256], sizes = [128, 64], strides = [1, 1]} : vector<128x384xf32> to vector<128x64xf32>
    %9 = arith.truncf %8 : vector<128x64xf32> to vector<128x64xbf16>
    %10 = tpu.transpose %7, [1, 0] : vector<128x64xbf16> -> vector<64x128xbf16>
    %cst_5 = arith.constant dense<0.000000e+00> : vector<128x128xf32>
    %11 = tpu.matmul %5, %10, %cst_5 {dimension_numbers = #tpu.dot_dimension_numbers<[1], [0], [0], [1], [0, 0, 1, 1], [], []>} : vector<128x64xbf16>, vector<64x128xbf16>, vector<128x128xf32> -> vector<128x128xf32>
    %12 = arith.addf %11, %3 : vector<128x128xf32>
    %cst_6 = arith.constant dense<0xFF800000> : vector<128xf32>
    %13 = vector.multi_reduction <maximumf>, %12, %cst_6 [1] : vector<128x128xf32> to vector<128xf32>
    %14 = vector.shape_cast %13 : vector<128xf32> to vector<128x1xf32>
    %15 = vector.broadcast %14 : vector<128x1xf32> to vector<128x128xf32>
    %16 = arith.subf %12, %15 : vector<128x128xf32>
    %17 = math.exp %16 : vector<128x128xf32>
    %cst_7 = arith.constant dense<0.000000e+00> : vector<128xf32>
    %18 = vector.multi_reduction <add>, %17, %cst_7 [1] : vector<128x128xf32> to vector<128xf32>
    %19 = vector.shape_cast %18 : vector<128xf32> to vector<128x1xf32>
    %20 = tpu.reciprocal %19 {approx = true} : vector<128x1xf32> -> vector<128x1xf32>
    %21 = vector.broadcast %20 : vector<128x1xf32> to vector<128x128xf32>
    %22 = arith.mulf %17, %21 : vector<128x128xf32>
    %23 = arith.truncf %22 : vector<128x128xf32> to vector<128x128xbf16>
    %cst_8 = arith.constant dense<0.000000e+00> : vector<128x64xf32>
    %24 = tpu.matmul %23, %9, %cst_8 {dimension_numbers = #tpu.dot_dimension_numbers<[1], [0], [0], [1], [0, 0, 1, 1], [], []>} : vector<128x128xbf16>, vector<128x64xbf16>, vector<128x64xf32> -> vector<128x64xf32>
    %25 = arith.truncf %24 : vector<128x64xf32> to vector<128x64xbf16>
    %c0_9 = arith.constant 0 : index
    %c0_10 = arith.constant 0 : index
    %26 = vector.load %arg7[%c0_9, %c0_10] : memref<128x128xbf16, #tpu.memory_space<vmem>>, vector<128x64xbf16>
    tpu.vector_store %arg7[%c0_9, %c0_10], %25 {strides = array<i32>} : memref<128x128xbf16, #tpu.memory_space<vmem>>, vector<128x64xbf16>,
    %27 = vector.extract_strided_slice %2 {offsets = [0, 64], sizes = [128, 64], strides = [1, 1]} : vector<128x384xf32> to vector<128x64xf32>
    %28 = arith.truncf %27 : vector<128x64xf32> to vector<128x64xbf16>
    %29 = vector.extract_strided_slice %2 {offsets = [0, 192], sizes = [128, 64], strides = [1, 1]} : vector<128x384xf32> to vector<128x64xf32>
    %30 = arith.truncf %29 : vector<128x64xf32> to vector<128x64xbf16>
    %31 = vector.extract_strided_slice %2 {offsets = [0, 320], sizes = [128, 64], strides = [1, 1]} : vector<128x384xf32> to vector<128x64xf32>
    %32 = arith.truncf %31 : vector<128x64xf32> to vector<128x64xbf16>
    %33 = tpu.transpose %30, [1, 0] : vector<128x64xbf16> -> vector<64x128xbf16>
    %cst_11 = arith.constant dense<0.000000e+00> : vector<128x128xf32>
    %34 = tpu.matmul %28, %33, %cst_11 {dimension_numbers = #tpu.dot_dimension_numbers<[1], [0], [0], [1], [0, 0, 1, 1], [], []>} : vector<128x64xbf16>, vector<64x128xbf16>, vector<128x128xf32> -> vector<128x128xf32>
    %35 = arith.addf %34, %3 : vector<128x128xf32>
    %cst_12 = arith.constant dense<0xFF800000> : vector<128xf32>
    %36 = vector.multi_reduction <maximumf>, %35, %cst_12 [1] : vector<128x128xf32> to vector<128xf32>
    %37 = vector.shape_cast %36 : vector<128xf32> to vector<128x1xf32>
    %38 = vector.broadcast %37 : vector<128x1xf32> to vector<128x128xf32>
    %39 = arith.subf %35, %38 : vector<128x128xf32>
    %40 = math.exp %39 : vector<128x128xf32>
    %cst_13 = arith.constant dense<0.000000e+00> : vector<128xf32>
    %41 = vector.multi_reduction <add>, %40, %cst_13 [1] : vector<128x128xf32> to vector<128xf32>
    %42 = vector.shape_cast %41 : vector<128xf32> to vector<128x1xf32>
    %43 = tpu.reciprocal %42 {approx = true} : vector<128x1xf32> -> vector<128x1xf32>
    %44 = vector.broadcast %43 : vector<128x1xf32> to vector<128x128xf32>
    %45 = arith.mulf %40, %44 : vector<128x128xf32>
    %46 = arith.truncf %45 : vector<128x128xf32> to vector<128x128xbf16>
    %cst_14 = arith.constant dense<0.000000e+00> : vector<128x64xf32>
    %47 = tpu.matmul %46, %32, %cst_14 {dimension_numbers = #tpu.dot_dimension_numbers<[1], [0], [0], [1], [0, 0, 1, 1], [], []>} : vector<128x128xbf16>, vector<128x64xbf16>, vector<128x64xf32> -> vector<128x64xf32>
    %48 = arith.truncf %47 : vector<128x64xf32> to vector<128x64xbf16>
    %c0_15 = arith.constant 0 : index
    %c64 = arith.constant 64 : index
    %49 = vector.load %arg7[%c0_15, %c64] : memref<128x128xbf16, #tpu.memory_space<vmem>>, vector<128x64xbf16>
    tpu.vector_store %arg7[%c0_15, %c64], %48 {strides = array<i32>} : memref<128x128xbf16, #tpu.memory_space<vmem>>, vector<128x64xbf16>,
    %c0_16 = arith.constant 0 : index
    %c0_17 = arith.constant 0 : index
    %50 = vector.load %arg7[%c0_16, %c0_17] : memref<128x128xbf16, #tpu.memory_space<vmem>>, vector<128x128xbf16>
    %c0_18 = arith.constant 0 : index
    %c0_19 = arith.constant 0 : index
    %51 = vector.load %arg3[%c0_18, %c0_19] : memref<128x128xbf16, #tpu.memory_space<vmem>>, vector<128x128xbf16>
    %cst_20 = arith.constant dense<0.000000e+00> : vector<128x128xf32>
    %52 = tpu.matmul %50, %51, %cst_20 {dimension_numbers = #tpu.dot_dimension_numbers<[1], [0], [0], [1], [0, 0, 1, 1], [], []>} : vector<128x128xbf16>, vector<128x128xbf16>, vector<128x128xf32> -> vector<128x128xf32>
    %c0_21 = arith.constant 0 : index
    %c0_22 = arith.constant 0 : index
    %53 = vector.load %arg4[%c0_21, %c0_22] : memref<1x128xf32, #tpu.memory_space<vmem>>, vector<1x128xf32>
    %54 = vector.broadcast %53 : vector<1x128xf32> to vector<128x128xf32>
    %55 = arith.addf %52, %54 : vector<128x128xf32>
    %c0_23 = arith.constant 0 : index
    %c0_24 = arith.constant 0 : index
    %56 = vector.load %arg6[%c0_23, %c0_24] : memref<128x128xf32, #tpu.memory_space<vmem>>, vector<128x128xf32>
    tpu.vector_store %arg6[%c0_23, %c0_24], %55 {strides = array<i32>} : memref<128x128xf32, #tpu.memory_space<vmem>>, vector<128x128xf32>,
    return
  }
  func.func @transform_0(%arg0: i32) -> (i32, i32) {
    %c0_i32 = arith.constant 0 : i32
    %c0_i32_0 = arith.constant 0 : i32
    return %arg0, %c0_i32 : i32, i32
  }
  func.func @transform_1(%arg0: i32) -> (i32, i32) {
    %c0_i32 = arith.constant 0 : i32
    %c0_i32_0 = arith.constant 0 : i32
    %c0_i32_1 = arith.constant 0 : i32
    return %c0_i32, %c0_i32_0 : i32, i32
  }
  func.func @transform_2(%arg0: i32) -> (i32, i32) {
    %c0_i32 = arith.constant 0 : i32
    %c0_i32_0 = arith.constant 0 : i32
    %c0_i32_1 = arith.constant 0 : i32
    return %c0_i32, %c0_i32_0 : i32, i32
  }
  func.func @transform_3(%arg0: i32) -> (i32, i32) {
    %c0_i32 = arith.constant 0 : i32
    %c0_i32_0 = arith.constant 0 : i32
    %c0_i32_1 = arith.constant 0 : i32
    return %c0_i32, %c0_i32_0 : i32, i32
  }
  func.func @transform_4(%arg0: i32) -> (i32, i32) {
    %c0_i32 = arith.constant 0 : i32
    %c0_i32_0 = arith.constant 0 : i32
    %c0_i32_1 = arith.constant 0 : i32
    return %c0_i32, %c0_i32_0 : i32, i32
  }
  func.func @transform_5(%arg0: i32) -> (i32, i32) {
    %c0_i32 = arith.constant 0 : i32
    %c0_i32_0 = arith.constant 0 : i32
    return %arg0, %c0_i32 : i32, i32
  }
}

</mosaic_0001>

<llo_original>
// kernel: tpu_custom_call.1
$region0: #{tpu_custom_call.1}
  #allocation0 [shape = 'u32[]', space=smem, size = 0x4, offset = 0x4, fixed_abs, tag = 'smem constant byte address 0x4 - core index']
  #allocation1 [shape = 'u32[72,128]{1,0:T(1,128)}', space=vmem, size = 0x9000, scoped, tag = 'internal scratch']
  #allocation2 [shape = 'bf16[128,128]{1,0:T(8,128)(2,1)}', space=vmem, size = 0x8000, scoped, tag = 'scratch operand']
  %s0 = inlined_call_operand.hbm [shape: bf16[512,128], index: 0, kind: input, shape index: {}]
  %s1 = inlined_call_operand.hbm [shape: bf16[128,384], index: 1, kind: input, shape index: {}]
  %s2 = inlined_call_operand.hbm [shape: bf16[128,128], index: 2, kind: input, shape index: {}]
  %s3 = inlined_call_operand.vmem [shape: f32[1,128], index: 3, kind: input, shape index: {}]
  %s4 = inlined_call_operand.hbm [shape: f32[128,128], index: 4, kind: input, shape index: {}]
  %s5 = inlined_call_operand.hbm [shape: f32[512,128], index: 5, kind: output, shape index: {}]
  %s6 = sld [smem:[#allocation0]]
  $region69: #{tpu_custom_call.1} parent=0
    _
  %s8 = ssub.s32 1, %s6
  %s9 = scalar_select 0, %s8, %s6
  $region1: #{tpu_custom_call.1} parent=0
    #allocation3 [shape = 'u8[65536]{0}', space=vmem, size = 0x10000, scoped, tag = 'input window, operand 0']
    #allocation4 [shape = 's32[2]{0}', space=sflag, size = 0x8, scoped, tag = 'scoped memory for tpu_custom_call.1']
    #allocation5 [shape = 's32[2]{0}', space=sflag, size = 0x8, scoped, tag = 'scoped memory for tpu_custom_call.1']
    #allocation6 [shape = 'u8[98304]{0}', space=vmem, size = 0x18000, scoped, tag = 'input window, operand 1, single buffered']
    #allocation7 [shape = 's32[1]{0}', space=sflag, size = 0x4, scoped, tag = 'scoped memory for tpu_custom_call.1']
    #allocation8 [shape = 'u8[32768]{0}', space=vmem, size = 0x8000, scoped, tag = 'input window, operand 2, single buffered']
    #allocation9 [shape = 'u8[65536]{0}', space=vmem, size = 0x10000, scoped, tag = 'input window, operand 4, single buffered']
    #allocation10 [shape = 's32[1]{0}', space=sflag, size = 0x4, scoped, tag = 'scoped memory for tpu_custom_call.1']
    #allocation11 [shape = 'u8[131072]{0}', space=vmem, size = 0x20000, scoped, tag = 'output window, operand 0']
    %10 = vsyncpa [#allocation4], 0
    %s11 = scalar_lea.sflag [#allocation4], 1
    %12 = vsyncpa %s11, 0
    %13 = vsyncpa [#allocation7], 0
    %14 = vsyncpa [#allocation10], 0
    %15 = vsyncpa [#allocation5], 0
    %s16 = scalar_lea.sflag [#allocation5], 1
    %17 = vsyncpa %s16, 0
    loop: start=0, step=1, limit=6
    $region2: #{tpu_custom_call.1} parent=1 // loop_pre_header
      _
    $region3: #{tpu_custom_call.1} parent=1 // loop_header
      %s19 = sphi 0, %s23
      %p20 = scmp.ge.s32.totalorder %s19, 6
      %s29 = sphi 0, %s31
      %s32 = sphi 0, %s29
      %s33 = sphi 0, %s32
      %s49 = sphi 0, %s33
      %s53 = sphi 0, %s53
      %s55 = sphi 0, %s53
      %s56 = sphi 0, %s55
      %s70 = sphi 0, %s56
      %s74 = sphi 0, %s74
      %s76 = sphi 0, %s74
      %s77 = sphi 0, %s76
      %s91 = sphi 0, %s77
      %s95 = sphi 0, %s95
      %s97 = sphi 0, %s95
      %s98 = sphi 0, %s97
      %s112 = sphi 0, %s98
      %s116 = sphi 0, %s116
      %s118 = sphi 0, %s116
      %s119 = sphi 0, %s118
      %s133 = sphi 0, %s119
      %s139 = sphi 0, %s141
      %s142 = sphi 0, %s139
      %s143 = sphi 0, %s142
      %s159 = sphi 0, %s143
    $region4: #{tpu_custom_call.1} parent=1 // loop_header_branch
      %22 = sbr.rel (%p20) target = $region8
    $region5: #{tpu_custom_call.1} parent=1 // loop_body
      %s24 = ssub.s32 %s19, 1
      %s25 = ssub.s32 %s19, 2
      %s26 = sadd.s32 %s19, 1
      %s27 = ssub.s32 %s19, %s26
      %p28 = scmp.eq.s32.totalorder %s27, 0
      %s30 = sadd.s32 %s29, 1
      %s31 = scalar_select %p28, %s29, %s30
      %p34 = pneg %p28
      %p35 = scmp.eq.s32.totalorder %s19, 3
      %p36 = por %p34, %p35
      %p37 = scmp.ne.s32.totalorder %s29, %s32
      %p38 = scmp.eq.s32.totalorder %s19, 0
      %p39 = por %p37, %p38
      %p40 = scmp.ne.s32.totalorder %s29, %s32
      %p41 = scmp.eq.s32.totalorder %s24, 3
      %p42 = por %p40, %p41
      %p43 = scmp.ne.s32.totalorder %s32, %s33
      %p44 = scmp.eq.s32.totalorder %s24, 0
      %p45 = por %p43, %p44
      %p46 = scmp.ne.s32.totalorder %s32, %s33
      %p47 = scmp.eq.s32.totalorder %s25, 3
      %p48 = por %p46, %p47
      %p50 = scmp.ne.s32.totalorder %s33, %s49
      %p51 = scmp.eq.s32.totalorder %s25, 0
      %p52 = por %p50, %p51
      %s54 = sadd.s32 %s53, 1
      %p57 = scmp.eq.s32.totalorder %s19, 3
      %p58 = scmp.ne.s32.totalorder %s53, %s55
      %p59 = scmp.eq.s32.totalorder %s19, 0
      %p60 = por %p58, %p59
      %p61 = scmp.ne.s32.totalorder %s53, %s55
      %p62 = scmp.eq.s32.totalorder %s24, 3
      %p63 = por %p61, %p62
      %p64 = scmp.ne.s32.totalorder %s55, %s56
      %p65 = scmp.eq.s32.totalorder %s24, 0
      %p66 = por %p64, %p65
      %p67 = scmp.ne.s32.totalorder %s55, %s56
      %p68 = scmp.eq.s32.totalorder %s25, 3
      %p69 = por %p67, %p68
      %p71 = scmp.ne.s32.totalorder %s56, %s70
      %p72 = scmp.eq.s32.totalorder %s25, 0
      %p73 = por %p71, %p72
      %s75 = sadd.s32 %s74, 1
      %p78 = scmp.eq.s32.totalorder %s19, 3
      %p79 = scmp.ne.s32.totalorder %s74, %s76
      %p80 = scmp.eq.s32.totalorder %s19, 0
      %p81 = por %p79, %p80
      %p82 = scmp.ne.s32.totalorder %s74, %s76
      %p83 = scmp.eq.s32.totalorder %s24, 3
      %p84 = por %p82, %p83
      %p85 = scmp.ne.s32.totalorder %s76, %s77
      %p86 = scmp.eq.s32.totalorder %s24, 0
      %p87 = por %p85, %p86
      %p88 = scmp.ne.s32.totalorder %s76, %s77
      %p89 = scmp.eq.s32.totalorder %s25, 3
      %p90 = por %p88, %p89
      %p92 = scmp.ne.s32.totalorder %s77, %s91
      %p93 = scmp.eq.s32.totalorder %s25, 0
      %p94 = por %p92, %p93
      %s96 = sadd.s32 %s95, 1
      %p99 = scmp.eq.s32.totalorder %s19, 3
      %p100 = scmp.ne.s32.totalorder %s95, %s97
      %p101 = scmp.eq.s32.totalorder %s19, 0
      %p102 = por %p100, %p101
      %p103 = scmp.ne.s32.totalorder %s95, %s97
      %p104 = scmp.eq.s32.totalorder %s24, 3
      %p105 = por %p103, %p104
      %p106 = scmp.ne.s32.totalorder %s97, %s98
      %p107 = scmp.eq.s32.totalorder %s24, 0
      %p108 = por %p106, %p107
      %p109 = scmp.ne.s32.totalorder %s97, %s98
      %p110 = scmp.eq.s32.totalorder %s25, 3
      %p111 = por %p109, %p110
      %p113 = scmp.ne.s32.totalorder %s98, %s112
      %p114 = scmp.eq.s32.totalorder %s25, 0
      %p115 = por %p113, %p114
      %s117 = sadd.s32 %s116, 1
      %p120 = scmp.eq.s32.totalorder %s19, 3
      %p121 = scmp.ne.s32.totalorder %s116, %s118
      %p122 = scmp.eq.s32.totalorder %s19, 0
      %p123 = por %p121, %p122
      %p124 = scmp.ne.s32.totalorder %s116, %s118
      %p125 = scmp.eq.s32.totalorder %s24, 3
      %p126 = por %p124, %p125
      %p127 = scmp.ne.s32.totalorder %s118, %s119
      %p128 = scmp.eq.s32.totalorder %s24, 0
      %p129 = por %p127, %p128
      %p130 = scmp.ne.s32.totalorder %s118, %s119
      %p131 = scmp.eq.s32.totalorder %s25, 3
      %p132 = por %p130, %p131
      %p134 = scmp.ne.s32.totalorder %s119, %s133
      %p135 = scmp.eq.s32.totalorder %s25, 0
      %p136 = por %p134, %p135
      %s137 = ssub.s32 %s19, %s26
      %p138 = scmp.eq.s32.totalorder %s137, 0
      %s140 = sadd.s32 %s139, 1
      %s141 = scalar_select %p138, %s139, %s140
      %p144 = pneg %p138
      %p145 = scmp.eq.s32.totalorder %s19, 3
      %p146 = por %p144, %p145
      %p147 = scmp.ne.s32.totalorder %s139, %s142
      %p148 = scmp.eq.s32.totalorder %s19, 0
      %p149 = por %p147, %p148
      %p150 = scmp.ne.s32.totalorder %s139, %s142
      %p151 = scmp.eq.s32.totalorder %s24, 3
      %p152 = por %p150, %p151
      %p153 = scmp.ne.s32.totalorder %s142, %s143
      %p154 = scmp.eq.s32.totalorder %s24, 0
      %p155 = por %p153, %p154
      %p156 = scmp.ne.s32.totalorder %s142, %s143
      %p157 = scmp.eq.s32.totalorder %s25, 3
      %p158 = por %p156, %p157
      %p160 = scmp.ne.s32.totalorder %s143, %s159
      %p161 = scmp.eq.s32.totalorder %s25, 0
      %p162 = por %p160, %p161
      %p163 = scmp.le.s32.totalorder 1, %s19
      %p164 = scmp.lt.s32.totalorder %s19, 5
      %p165 = pnand %p163, %p164
      %p166 = pneg %p165
      // Predicated region
      $region9: #{tpu_custom_call.1} parent=5 // pred_check
        _
      $region10: #{tpu_custom_call.1} parent=5 // pred_check_branch
        %168 = sbr.rel (%p165) target = $region12
      $region11: #{tpu_custom_call.1} parent=5 // pred_region
        %s169 = ssub.s32 %s19, 1
        // Predicated region
        $region13: #{tpu_custom_call.1} parent=11 // pred_check
          %p170 = pneg %p66
        $region14: #{tpu_custom_call.1} parent=11 // pred_check_branch
          %172 = sbr.rel (%p170) target = $region16
        $region15: #{tpu_custom_call.1} parent=11 // pred_region
          %174 = vsyncadd [#allocation7], 0
          %s175 = sshll.u32 %s1, 4
          %s176 = int_to_ptr.hbm [resolvable:$true] %s175
          %s177 = sshll.u32 [#allocation6], 4
          %s178 = int_to_ptr.vmem [resolvable:$true] %s177
          %183 = dma.hbm_to_vmem [thread:$0]  %s176, 3072, %s178, [#allocation7], 192, 192, 12
        $region16: #{tpu_custom_call.1} parent=11 // pred_fallthru
          _
        // Predicated region
        $region17: #{tpu_custom_call.1} parent=11 // pred_check
          %p184 = pneg %p87
        $region18: #{tpu_custom_call.1} parent=11 // pred_check_branch
          %186 = sbr.rel (%p184) target = $region20
        $region19: #{tpu_custom_call.1} parent=11 // pred_region
          %188 = vsyncadd [#allocation7], 0
          %s189 = sshll.u32 %s2, 4
          %s190 = int_to_ptr.hbm [resolvable:$true] %s189
          %s191 = sshll.u32 [#allocation8], 4
          %s192 = int_to_ptr.vmem [resolvable:$true] %s191
          %197 = dma.hbm_to_vmem [thread:$0]  %s190, 1024, %s192, [#allocation7], 64, 64, 4
        $region20: #{tpu_custom_call.1} parent=11 // pred_fallthru
          _
        // Predicated region
        $region21: #{tpu_custom_call.1} parent=11 // pred_check
          %p198 = pneg %p108
        $region22: #{tpu_custom_call.1} parent=11 // pred_check_branch
          %200 = sbr.rel (%p198) target = $region24
        $region23: #{tpu_custom_call.1} parent=11 // pred_region
          _
        $region24: #{tpu_custom_call.1} parent=11 // pred_fallthru
          _
        // Predicated region
        $region25: #{tpu_custom_call.1} parent=11 // pred_check
          %p201 = pneg %p129
        $region26: #{tpu_custom_call.1} parent=11 // pred_check_branch
          %203 = sbr.rel (%p201) target = $region28
        $region27: #{tpu_custom_call.1} parent=11 // pred_region
          %205 = vsyncadd [#allocation10], 0
          %s206 = sshll.u32 %s4, 4
          %s207 = int_to_ptr.hbm [resolvable:$true] %s206
          %s208 = sshll.u32 [#allocation9], 4
          %s209 = int_to_ptr.vmem [resolvable:$true] %s208
          %214 = dma.hbm_to_vmem [thread:$0]  %s207, 2048, %s209, [#allocation10], 128, 128, 8
        $region28: #{tpu_custom_call.1} parent=11 // pred_fallthru
          _
      $region12: #{tpu_custom_call.1} parent=5 // pred_fallthru
        _
      %p215 = scmp.lt.s32.totalorder %s19, 4
      // Predicated region
      $region29: #{tpu_custom_call.1} parent=5 // pred_check
        %p216 = pneg %p215
      $region30: #{tpu_custom_call.1} parent=5 // pred_check_branch
        %218 = sbr.rel (%p216) target = $region32
      $region31: #{tpu_custom_call.1} parent=5 // pred_region
        // Predicated region
        $region33: #{tpu_custom_call.1} parent=31 // pred_check
          %p219 = pneg %p39
        $region34: #{tpu_custom_call.1} parent=31 // pred_check_branch
          %221 = sbr.rel (%p219) target = $region36
        $region35: #{tpu_custom_call.1} parent=31 // pred_region
          %s222 = sand.u32 %s29, 1
          %s223 = scalar_lea.sflag [#allocation4], %s222
          %s224 = sand.u32 %s29, 1
          %s225 = smul.addr %s224, 64
          %s226 = scalar_lea.vmem [#allocation3], %s225
          %s227 = smul.u32 16, %s19
          %229 = vsyncadd %s223, 0
          %s230 = smul.addr %s227, 4
          %s231 = scalar_lea.hbm %s0, %s230
          %s232 = sshll.u32 %s231, 4
          %s233 = int_to_ptr.hbm [resolvable:$true] %s232
          %s234 = sshll.u32 %s226, 4
          %s235 = int_to_ptr.vmem [resolvable:$true] %s234
          %240 = dma.hbm_to_vmem [thread:$0]  %s233, 1024, %s235, %s223, 64, 64, 4
        $region36: #{tpu_custom_call.1} parent=31 // pred_fallthru
          _
      $region32: #{tpu_custom_call.1} parent=5 // pred_fallthru
        _
      %p241 = scmp.le.s32.totalorder 1, %s19
      %p242 = scmp.lt.s32.totalorder %s19, 5
      %p243 = pnand %p241, %p242
      %p244 = pneg %p243
      // Predicated region
      $region37: #{tpu_custom_call.1} parent=5 // pred_check
        _
      $region38: #{tpu_custom_call.1} parent=5 // pred_check_branch
        %246 = sbr.rel (%p243) target = $region40
      $region39: #{tpu_custom_call.1} parent=5 // pred_region
        %s247 = ssub.s32 %s19, 1
        %s248 = sand.u32 %s32, 1
        %s249 = scalar_lea.sflag [#allocation4], %s248
        %s250 = sand.u32 %s32, 1
        %s251 = smul.addr %s250, 64
        %s252 = scalar_lea.vmem [#allocation3], %s251
        // Predicated region
        $region41: #{tpu_custom_call.1} parent=39 // pred_check
          %p253 = pneg %p45
        $region42: #{tpu_custom_call.1} parent=39 // pred_check_branch
          %255 = sbr.rel (%p253) target = $region44
        $region43: #{tpu_custom_call.1} parent=39 // pred_region
          %257 = dma.done %s249, 1024
        $region44: #{tpu_custom_call.1} parent=39 // pred_fallthru
          _
        // Predicated region
        $region45: #{tpu_custom_call.1} parent=39 // pred_check
          %p258 = pneg %p66
        $region46: #{tpu_custom_call.1} parent=39 // pred_check_branch
          %260 = sbr.rel (%p258) target = $region48
        $region47: #{tpu_custom_call.1} parent=39 // pred_region
          %262 = dma.done [#allocation7], 3072
        $region48: #{tpu_custom_call.1} parent=39 // pred_fallthru
          _
        // Predicated region
        $region49: #{tpu_custom_call.1} parent=39 // pred_check
          %p263 = pneg %p87
        $region50: #{tpu_custom_call.1} parent=39 // pred_check_branch
          %265 = sbr.rel (%p263) target = $region52
        $region51: #{tpu_custom_call.1} parent=39 // pred_region
          %267 = dma.done [#allocation7], 1024
        $region52: #{tpu_custom_call.1} parent=39 // pred_fallthru
          _
        // Predicated region
        $region53: #{tpu_custom_call.1} parent=39 // pred_check
          %p268 = pneg %p129
        $region54: #{tpu_custom_call.1} parent=39 // pred_check_branch
          %270 = sbr.rel (%p268) target = $region56
        $region55: #{tpu_custom_call.1} parent=39 // pred_region
          %272 = dma.done [#allocation10], 2048
        $region56: #{tpu_custom_call.1} parent=39 // pred_fallthru
          _
        %s273 = sand.u32 %s32, 1
        %s274 = scalar_lea.sflag [#allocation4], %s273
        %s275 = sand.u32 %s32, 1
        %s276 = smul.addr %s275, 64
        %s277 = scalar_lea.vmem [#allocation3], %s276
        %p278 = pneg %p45
        %p279 = pneg %p42
        %p280 = pneg %p66
        %p281 = pneg %p63
        %p282 = pneg %p87
        %p283 = pneg %p84
        %p284 = pneg %p108
        %p285 = pneg %p105
        %p286 = pneg %p129
        %p287 = pneg %p126
        %p288 = pneg %p155
        %p289 = pneg %p152
        %s290 = sand.u32 %s142, 1
        %s291 = scalar_lea.sflag [#allocation5], %s290
        %s292 = sand.u32 %s142, 1
        %s293 = smul.addr %s292, 128
        %s294 = scalar_lea.vmem [#allocation11], %s293
        %s295 = smul.u32 16, %s24
        %s296 = smul.u32 16, %s24
        %v297 = vld [vmem:[%s252] sm:$0xf]
        %v298 = vld [vmem:[%s252 + $0x4] sm:$0xf]
        %v299 = vld [vmem:[%s252 + $0x8] sm:$0xf]
        %v300 = vld [vmem:[%s252 + $0xc] sm:$0xf]
        %v301 = vld [vmem:[%s252 + $0x10] sm:$0xf]
        %v302 = vld [vmem:[%s252 + $0x14] sm:$0xf]
        %v303 = vld [vmem:[%s252 + $0x18] sm:$0xf]
        %v304 = vld [vmem:[%s252 + $0x1c] sm:$0xf]
        %v305 = vld [vmem:[%s252 + $0x20] sm:$0xf]
        %v306 = vld [vmem:[%s252 + $0x24] sm:$0xf]
        %v307 = vld [vmem:[%s252 + $0x28] sm:$0xf]
        %v308 = vld [vmem:[%s252 + $0x2c] sm:$0xf]
        %v309 = vld [vmem:[%s252 + $0x30] sm:$0xf]
        %v310 = vld [vmem:[%s252 + $0x34] sm:$0xf]
        %v311 = vld [vmem:[%s252 + $0x38] sm:$0xf]
        %v312 = vld [vmem:[%s252 + $0x3c] sm:$0xf]
        %v313 = vld [vmem:[#allocation6] sm:$0xff]
        %v314 = vld [vmem:[#allocation6 + $0x8] sm:$0xf]
        %v315 = vld [vmem:[#allocation6 + $0xc] sm:$0xff]
        %v316 = vld [vmem:[#allocation6 + $0x14] sm:$0xf]
        %v317 = vld [vmem:[#allocation6 + $0x18] sm:$0xff]
        %v318 = vld [vmem:[#allocation6 + $0x20] sm:$0xf]
        %v319 = vld [vmem:[#allocation6 + $0x24] sm:$0xff]
        %v320 = vld [vmem:[#allocation6 + $0x2c] sm:$0xf]
        %v321 = vld [vmem:[#allocation6 + $0x30] sm:$0xff]
        %v322 = vld [vmem:[#allocation6 + $0x38] sm:$0xf]
        %v323 = vld [vmem:[#allocation6 + $0x3c] sm:$0xff]
        %v324 = vld [vmem:[#allocation6 + $0x44] sm:$0xf]
        %v325 = vld [vmem:[#allocation6 + $0x48] sm:$0xff]
        %v326 = vld [vmem:[#allocation6 + $0x50] sm:$0xf]
        %v327 = vld [vmem:[#allocation6 + $0x54] sm:$0xff]
        %v328 = vld [vmem:[#allocation6 + $0x5c] sm:$0xf]
        %v329 = vld [vmem:[#allocation6 + $0x60] sm:$0xff]
        %v330 = vld [vmem:[#allocation6 + $0x68] sm:$0xf]
        %v331 = vld [vmem:[#allocation6 + $0x6c] sm:$0xff]
        %v332 = vld [vmem:[#allocation6 + $0x74] sm:$0xf]
        %v333 = vld [vmem:[#allocation6 + $0x78] sm:$0xff]
        %v334 = vld [vmem:[#allocation6 + $0x80] sm:$0xf]
        %v335 = vld [vmem:[#allocation6 + $0x84] sm:$0xff]
        %v336 = vld [vmem:[#allocation6 + $0x8c] sm:$0xf]
        %v337 = vld [vmem:[#allocation6 + $0x90] sm:$0xff]
        %v338 = vld [vmem:[#allocation6 + $0x98] sm:$0xf]
        %v339 = vld [vmem:[#allocation6 + $0x9c] sm:$0xff]
        %v340 = vld [vmem:[#allocation6 + $0xa4] sm:$0xf]
        %v341 = vld [vmem:[#allocation6 + $0xa8] sm:$0xff]
        %v342 = vld [vmem:[#allocation6 + $0xb0] sm:$0xf]
        %v343 = vld [vmem:[#allocation6 + $0xb4] sm:$0xff]
        %v344 = vld [vmem:[#allocation6 + $0xbc] sm:$0xf]
        %v361 = vunpack.c.l.b16 %v297
        %v362 = vunpack.c.l.b16 %v298
        %v363 = vunpack.c.l.b16 %v299
        %v364 = vunpack.c.l.b16 %v300
        %v365 = vunpack.c.l.b16 %v301
        %v366 = vunpack.c.l.b16 %v302
        %v367 = vunpack.c.l.b16 %v303
        %v368 = vunpack.c.l.b16 %v304
        %v369 = vunpack.c.l.b16 %v305
        %v370 = vunpack.c.l.b16 %v306
        %v371 = vunpack.c.l.b16 %v307
        %v372 = vunpack.c.l.b16 %v308
        %v373 = vunpack.c.l.b16 %v309
        %v374 = vunpack.c.l.b16 %v310
        %v375 = vunpack.c.l.b16 %v311
        %v376 = vunpack.c.l.b16 %v312
        %v377 = vpack.c.b16 %v362, %v361
        %v378 = vpack.c.b16 %v364, %v363
        %v379 = vpack.c.b16 %v366, %v365
        %v380 = vpack.c.b16 %v368, %v367
        %v381 = vpack.c.b16 %v370, %v369
        %v382 = vpack.c.b16 %v372, %v371
        %v383 = vpack.c.b16 %v374, %v373
        %v384 = vpack.c.b16 %v376, %v375
        %v425 = vunpack.c.l.b16 %v313
        %v426 = vunpack.c.h.b16 %v313
        %v427 = vunpack.c.l.b16 %v314
        %v428 = vunpack.c.l.b16 %v315
        %v429 = vunpack.c.h.b16 %v315
        %v430 = vunpack.c.l.b16 %v316
        %v431 = vunpack.c.l.b16 %v317
        %v432 = vunpack.c.h.b16 %v317
        %v433 = vunpack.c.l.b16 %v318
        %v434 = vunpack.c.l.b16 %v319
        %v435 = vunpack.c.h.b16 %v319
        %v436 = vunpack.c.l.b16 %v320
        %v437 = vunpack.c.l.b16 %v321
        %v438 = vunpack.c.h.b16 %v321
        %v439 = vunpack.c.l.b16 %v322
        %v440 = vunpack.c.l.b16 %v323
        %v441 = vunpack.c.h.b16 %v323
        %v442 = vunpack.c.l.b16 %v324
        %v443 = vunpack.c.l.b16 %v325
        %v444 = vunpack.c.h.b16 %v325
        %v445 = vunpack.c.l.b16 %v326
        %v446 = vunpack.c.l.b16 %v327
        %v447 = vunpack.c.h.b16 %v327
        %v448 = vunpack.c.l.b16 %v328
        %v449 = vunpack.c.l.b16 %v329
        %v450 = vunpack.c.h.b16 %v329
        %v451 = vunpack.c.l.b16 %v330
        %v452 = vunpack.c.l.b16 %v331
        %v453 = vunpack.c.h.b16 %v331
        %v454 = vunpack.c.l.b16 %v332
        %v455 = vunpack.c.l.b16 %v333
        %v456 = vunpack.c.h.b16 %v333
        %v457 = vunpack.c.l.b16 %v334
        %v458 = vunpack.c.l.b16 %v335
        %v459 = vunpack.c.h.b16 %v335
        %v460 = vunpack.c.l.b16 %v336
        %v461 = vunpack.c.l.b16 %v337
        %v462 = vunpack.c.h.b16 %v337
        %v463 = vunpack.c.l.b16 %v338
        %v464 = vunpack.c.l.b16 %v339
        %v465 = vunpack.c.h.b16 %v339
        %v466 = vunpack.c.l.b16 %v340
        %v467 = vunpack.c.l.b16 %v341
        %v468 = vunpack.c.h.b16 %v341
        %v469 = vunpack.c.l.b16 %v342
        %v470 = vunpack.c.l.b16 %v343
        %v471 = vunpack.c.h.b16 %v343
        %v472 = vunpack.c.l.b16 %v344
        %v473 = vpack.c.b16 %v428, %v425
        %v474 = vpack.c.b16 %v429, %v426
        %v475 = vpack.c.b16 %v430, %v427
        %v476 = vpack.c.b16 %v434, %v431
        %v477 = vpack.c.b16 %v435, %v432
        %v478 = vpack.c.b16 %v436, %v433
        %v479 = vpack.c.b16 %v440, %v437
        %v480 = vpack.c.b16 %v441, %v438
        %v481 = vpack.c.b16 %v442, %v439
        %v482 = vpack.c.b16 %v446, %v443
        %v483 = vpack.c.b16 %v447, %v444
        %v484 = vpack.c.b16 %v448, %v445
        %v485 = vpack.c.b16 %v452, %v449
        %v486 = vpack.c.b16 %v453, %v450
        %v487 = vpack.c.b16 %v454, %v451
        %v488 = vpack.c.b16 %v458, %v455
        %v489 = vpack.c.b16 %v459, %v456
        %v490 = vpack.c.b16 %v460, %v457
        %v491 = vpack.c.b16 %v464, %v461
        %v492 = vpack.c.b16 %v465, %v462
        %v493 = vpack.c.b16 %v466, %v463
        %v494 = vpack.c.b16 %v470, %v467
        %v495 = vpack.c.b16 %v471, %v468
        %v496 = vpack.c.b16 %v472, %v469
        %521 = vmatpush.bf16.msra.mxu0 %v494
        %522 = vmatpush.bf16.msra.mxu0 %v491
        %523 = vmatpush.bf16.msra.mxu0 %v488
        %524 = vmatpush.bf16.msra.mxu0 %v485
        %525 = vmatpush.bf16.msra.mxu0 %v482
        %526 = vmatpush.bf16.msra.mxu0 %v479
        %527 = vmatpush.bf16.msra.mxu0 %v476
        %528 = vmatpush.bf16.msra.mxu0 %v473
        %529 = vmatmul.bf16.gmra.mxu0 %v377
        %v530 = vpop.f32.mrf.mxu0
        %v531 = vadd.f32 0.0, %v530
        %v532 = vpop.f32.mrf.mxu0
        %v533 = vadd.f32 0.0, %v532
        %534 = vmatmul.bf16.gmra.mxu0 %v378
        %v535 = vpop.f32.mrf.mxu0
        %v536 = vadd.f32 0.0, %v535
        %v537 = vpop.f32.mrf.mxu0
        %v538 = vadd.f32 0.0, %v537
        %539 = vmatmul.bf16.gmra.mxu0 %v379
        %v540 = vpop.f32.mrf.mxu0
        %v541 = vadd.f32 0.0, %v540
        %v542 = vpop.f32.mrf.mxu0
        %v543 = vadd.f32 0.0, %v542
        %544 = vmatmul.bf16.gmra.mxu0 %v380
        %v545 = vpop.f32.mrf.mxu0
        %v546 = vadd.f32 0.0, %v545
        %v547 = vpop.f32.mrf.mxu0
        %v548 = vadd.f32 0.0, %v547
        %549 = vmatmul.bf16.gmra.mxu0 %v381
        %v550 = vpop.f32.mrf.mxu0
        %v551 = vadd.f32 0.0, %v550
        %v552 = vpop.f32.mrf.mxu0
        %v553 = vadd.f32 0.0, %v552
        %554 = vmatmul.bf16.gmra.mxu0 %v382
        %v555 = vpop.f32.mrf.mxu0
        %v556 = vadd.f32 0.0, %v555
        %v557 = vpop.f32.mrf.mxu0
        %v558 = vadd.f32 0.0, %v557
        %559 = vmatmul.bf16.gmra.mxu0 %v383
        %v560 = vpop.f32.mrf.mxu0
        %v561 = vadd.f32 0.0, %v560
        %v562 = vpop.f32.mrf.mxu0
        %v563 = vadd.f32 0.0, %v562
        %564 = vmatmul.bf16.gmra.mxu0 %v384
        %v565 = vpop.f32.mrf.mxu0
        %v566 = vadd.f32 0.0, %v565
        %v567 = vpop.f32.mrf.mxu0
        %v568 = vadd.f32 0.0, %v567
        %569 = vdwg.mxu0
        %570 = vmatpush.bf16.msra.mxu0 %v495
        %571 = vmatpush.bf16.msra.mxu0 %v492
        %572 = vmatpush.bf16.msra.mxu0 %v489
        %573 = vmatpush.bf16.msra.mxu0 %v486
        %574 = vmatpush.bf16.msra.mxu0 %v483
        %575 = vmatpush.bf16.msra.mxu0 %v480
        %576 = vmatpush.bf16.msra.mxu0 %v477
        %577 = vmatpush.bf16.msra.mxu0 %v474
        %578 = vmatmul.bf16.gmra.mxu0 %v377
        %v579 = vpop.f32.mrf.mxu0
        %v580 = vadd.f32 0.0, %v579
        %v581 = vpop.f32.mrf.mxu0
        %v582 = vadd.f32 0.0, %v581
        %583 = vmatmul.bf16.gmra.mxu0 %v378
        %v584 = vpop.f32.mrf.mxu0
        %v585 = vadd.f32 0.0, %v584
        %v586 = vpop.f32.mrf.mxu0
        %v587 = vadd.f32 0.0, %v586
        %588 = vmatmul.bf16.gmra.mxu0 %v379
        %v589 = vpop.f32.mrf.mxu0
        %v590 = vadd.f32 0.0, %v589
        %v591 = vpop.f32.mrf.mxu0
        %v592 = vadd.f32 0.0, %v591
        %593 = vmatmul.bf16.gmra.mxu0 %v380
        %v594 = vpop.f32.mrf.mxu0
        %v595 = vadd.f32 0.0, %v594
        %v596 = vpop.f32.mrf.mxu0
        %v597 = vadd.f32 0.0, %v596
        %598 = vmatmul.bf16.gmra.mxu0 %v381
        %v599 = vpop.f32.mrf.mxu0
        %v600 = vadd.f32 0.0, %v599
        %v601 = vpop.f32.mrf.mxu0
        %v602 = vadd.f32 0.0, %v601
        %603 = vmatmul.bf16.gmra.mxu0 %v382
        %v604 = vpop.f32.mrf.mxu0
        %v605 = vadd.f32 0.0, %v604
        %v606 = vpop.f32.mrf.mxu0
        %v607 = vadd.f32 0.0, %v606
        %608 = vmatmul.bf16.gmra.mxu0 %v383
        %v609 = vpop.f32.mrf.mxu0
        %v610 = vadd.f32 0.0, %v609
        %v611 = vpop.f32.mrf.mxu0
        %v612 = vadd.f32 0.0, %v611
        %613 = vmatmul.bf16.gmra.mxu0 %v384
        %v614 = vpop.f32.mrf.mxu0
        %v615 = vadd.f32 0.0, %v614
        %v616 = vpop.f32.mrf.mxu0
        %v617 = vadd.f32 0.0, %v616
        %618 = vdwg.mxu0
        %619 = vmatpush.bf16.msra.mxu0 %v496
        %620 = vmatpush.bf16.msra.mxu0 %v493
        %621 = vmatpush.bf16.msra.mxu0 %v490
        %622 = vmatpush.bf16.msra.mxu0 %v487
        %623 = vmatpush.bf16.msra.mxu0 %v484
        %624 = vmatpush.bf16.msra.mxu0 %v481
        %625 = vmatpush.bf16.msra.mxu0 %v478
        %626 = vmatpush.bf16.msra.mxu0 %v475
        %627 = vmatmul.bf16.gmra.mxu0 %v377
        %v628 = vpop.f32.mrf.mxu0
        %v629 = vadd.f32 0.0, %v628
        %v630 = vpop.f32.mrf.mxu0
        %v631 = vadd.f32 0.0, %v630
        %632 = vmatmul.bf16.gmra.mxu0 %v378
        %v633 = vpop.f32.mrf.mxu0
        %v634 = vadd.f32 0.0, %v633
        %v635 = vpop.f32.mrf.mxu0
        %v636 = vadd.f32 0.0, %v635
        %637 = vmatmul.bf16.gmra.mxu0 %v379
        %v638 = vpop.f32.mrf.mxu0
        %v639 = vadd.f32 0.0, %v638
        %v640 = vpop.f32.mrf.mxu0
        %v641 = vadd.f32 0.0, %v640
        %642 = vmatmul.bf16.gmra.mxu0 %v380
        %v643 = vpop.f32.mrf.mxu0
        %v644 = vadd.f32 0.0, %v643
        %v645 = vpop.f32.mrf.mxu0
        %v646 = vadd.f32 0.0, %v645
        %647 = vmatmul.bf16.gmra.mxu0 %v381
        %v648 = vpop.f32.mrf.mxu0
        %v649 = vadd.f32 0.0, %v648
        %v650 = vpop.f32.mrf.mxu0
        %v651 = vadd.f32 0.0, %v650
        %652 = vmatmul.bf16.gmra.mxu0 %v382
        %v653 = vpop.f32.mrf.mxu0
        %v654 = vadd.f32 0.0, %v653
        %v655 = vpop.f32.mrf.mxu0
        %v656 = vadd.f32 0.0, %v655
        %657 = vmatmul.bf16.gmra.mxu0 %v383
        %v658 = vpop.f32.mrf.mxu0
        %v659 = vadd.f32 0.0, %v658
        %v660 = vpop.f32.mrf.mxu0
        %v661 = vadd.f32 0.0, %v660
        %662 = vmatmul.bf16.gmra.mxu0 %v384
        %v663 = vpop.f32.mrf.mxu0
        %v664 = vadd.f32 0.0, %v663
        %v665 = vpop.f32.mrf.mxu0
        %v666 = vadd.f32 0.0, %v665
        %667 = vdwg.mxu0
        %v668 = vld [vmem:[#allocation9] sm:$0xff]
        %v669 = vld [vmem:[#allocation9 + $0x8] sm:$0xff]
        %v670 = vld [vmem:[#allocation9 + $0x10] sm:$0xff]
        %v671 = vld [vmem:[#allocation9 + $0x18] sm:$0xff]
        %v672 = vld [vmem:[#allocation9 + $0x20] sm:$0xff]
        %v673 = vld [vmem:[#allocation9 + $0x28] sm:$0xff]
        %v674 = vld [vmem:[#allocation9 + $0x30] sm:$0xff]
        %v675 = vld [vmem:[#allocation9 + $0x38] sm:$0xff]
        %v676 = vld [vmem:[#allocation9 + $0x40] sm:$0xff]
        %v677 = vld [vmem:[#allocation9 + $0x48] sm:$0xff]
        %v678 = vld [vmem:[#allocation9 + $0x50] sm:$0xff]
        %v679 = vld [vmem:[#allocation9 + $0x58] sm:$0xff]
        %v680 = vld [vmem:[#allocation9 + $0x60] sm:$0xff]
        %v681 = vld [vmem:[#allocation9 + $0x68] sm:$0xff]
        %v682 = vld [vmem:[#allocation9 + $0x70] sm:$0xff]
        %v683 = vld [vmem:[#allocation9 + $0x78] sm:$0xff]
        %v684 = vpack.c.bf16 %v533, %v531
        %v685 = vpack.c.bf16 %v538, %v536
        %v686 = vpack.c.bf16 %v543, %v541
        %v687 = vpack.c.bf16 %v548, %v546
        %v688 = vpack.c.bf16 %v553, %v551
        %v689 = vpack.c.bf16 %v558, %v556
        %v690 = vpack.c.bf16 %v563, %v561
        %v691 = vpack.c.bf16 %v568, %v566
        %v692 = vpack.c.bf16 %v582, %v580
        %v693 = vpack.c.bf16 %v587, %v585
        %v694 = vpack.c.bf16 %v592, %v590
        %v695 = vpack.c.bf16 %v597, %v595
        %v696 = vpack.c.bf16 %v602, %v600
        %v697 = vpack.c.bf16 %v607, %v605
        %v698 = vpack.c.bf16 %v612, %v610
        %v699 = vpack.c.bf16 %v617, %v615
        %v700 = vpack.c.bf16 %v631, %v629
        %v701 = vpack.c.bf16 %v636, %v634
        %v702 = vpack.c.bf16 %v641, %v639
        %v703 = vpack.c.bf16 %v646, %v644
        %v704 = vpack.c.bf16 %v651, %v649
        %v705 = vpack.c.bf16 %v656, %v654
        %v706 = vpack.c.bf16 %v661, %v659
        %v707 = vpack.c.bf16 %v666, %v664
        %vm708 = vcmask 523264
        %v710 = vsel %vm708, %v684, 0
        %v713 = vsel %vm708, %v685, 0
        %v716 = vsel %vm708, %v686, 0
        %v719 = vsel %vm708, %v687, 0
        %v722 = vsel %vm708, %v688, 0
        %v725 = vsel %vm708, %v689, 0
        %v728 = vsel %vm708, %v690, 0
        %v731 = vsel %vm708, %v691, 0
        %v734 = vsel %vm708, %v692, 0
        %v737 = vsel %vm708, %v693, 0
        %v740 = vsel %vm708, %v694, 0
        %v743 = vsel %vm708, %v695, 0
        %v746 = vsel %vm708, %v696, 0
        %v749 = vsel %vm708, %v697, 0
        %v752 = vsel %vm708, %v698, 0
        %v755 = vsel %vm708, %v699, 0
        %757 = vmatpush.bf16.xpose.msra.mxu0 %v755
        %758 = vmatpush.bf16.xpose.msra.mxu0 %v752
        %759 = vmatpush.bf16.xpose.msra.mxu0 %v749
        %760 = vmatpush.bf16.xpose.msra.mxu0 %v746
        %761 = vmatpush.bf16.xpose.msra.mxu0 %v743
        %762 = vmatpush.bf16.xpose.msra.mxu0 %v740
        %763 = vmatpush.bf16.xpose.msra.mxu0 %v737
        %764 = vmatpush.bf16.xpose.msra.mxu0 %v734
        %765 = vmatmul.bf16.gmra.mxu0 %v710
        %v766 = vpop.f32.mrf.mxu0
        %v767 = vadd.f32 %v668, %v766
        %v768 = vpop.f32.mrf.mxu0
        %v769 = vadd.f32 %v669, %v768
        %770 = vmatmul.bf16.gmra.mxu0 %v713
        %v771 = vpop.f32.mrf.mxu0
        %v772 = vadd.f32 %v670, %v771
        %v773 = vpop.f32.mrf.mxu0
        %v774 = vadd.f32 %v671, %v773
        %775 = vmatmul.bf16.gmra.mxu0 %v716
        %v776 = vpop.f32.mrf.mxu0
        %v777 = vadd.f32 %v672, %v776
        %v778 = vpop.f32.mrf.mxu0
        %v779 = vadd.f32 %v673, %v778
        %780 = vmatmul.bf16.gmra.mxu0 %v719
        %v781 = vpop.f32.mrf.mxu0
        %v782 = vadd.f32 %v674, %v781
        %v783 = vpop.f32.mrf.mxu0
        %v784 = vadd.f32 %v675, %v783
        %785 = vmatmul.bf16.gmra.mxu0 %v722
        %v786 = vpop.f32.mrf.mxu0
        %v787 = vadd.f32 %v676, %v786
        %v788 = vpop.f32.mrf.mxu0
        %v789 = vadd.f32 %v677, %v788
        %790 = vmatmul.bf16.gmra.mxu0 %v725
        %v791 = vpop.f32.mrf.mxu0
        %v792 = vadd.f32 %v678, %v791
        %v793 = vpop.f32.mrf.mxu0
        %v794 = vadd.f32 %v679, %v793
        %795 = vmatmul.bf16.gmra.mxu0 %v728
        %v796 = vpop.f32.mrf.mxu0
        %v797 = vadd.f32 %v680, %v796
        %v798 = vpop.f32.mrf.mxu0
        %v799 = vadd.f32 %v681, %v798
        %800 = vmatmul.bf16.gmra.mxu0 %v731
        %v801 = vpop.f32.mrf.mxu0
        %v802 = vadd.f32 %v682, %v801
        %v803 = vpop.f32.mrf.mxu0
        %v804 = vadd.f32 %v683, %v803
        %805 = vdwg.mxu0
        %806 = vmax.xlane.f32.xlu0 %v767
        %v807 = vpop.xlane.xlu0 %806
        %808 = vmax.xlane.f32.xlu0 %v769
        %v809 = vpop.xlane.xlu0 %808
        %810 = vmax.xlane.f32.xlu0 %v772
        %v811 = vpop.xlane.xlu0 %810
        %812 = vmax.xlane.f32.xlu0 %v774
        %v813 = vpop.xlane.xlu0 %812
        %814 = vmax.xlane.f32.xlu0 %v777
        %v815 = vpop.xlane.xlu0 %814
        %816 = vmax.xlane.f32.xlu0 %v779
        %v817 = vpop.xlane.xlu0 %816
        %818 = vmax.xlane.f32.xlu0 %v782
        %v819 = vpop.xlane.xlu0 %818
        %820 = vmax.xlane.f32.xlu0 %v784
        %v821 = vpop.xlane.xlu0 %820
        %822 = vmax.xlane.f32.xlu0 %v787
        %v823 = vpop.xlane.xlu0 %822
        %824 = vmax.xlane.f32.xlu0 %v789
        %v825 = vpop.xlane.xlu0 %824
        %826 = vmax.xlane.f32.xlu0 %v792
        %v827 = vpop.xlane.xlu0 %826
        %828 = vmax.xlane.f32.xlu0 %v794
        %v829 = vpop.xlane.xlu0 %828
        %830 = vmax.xlane.f32.xlu0 %v797
        %v831 = vpop.xlane.xlu0 %830
        %832 = vmax.xlane.f32.xlu0 %v799
        %v833 = vpop.xlane.xlu0 %832
        %834 = vmax.xlane.f32.xlu0 %v802
        %v835 = vpop.xlane.xlu0 %834
        %836 = vmax.xlane.f32.xlu0 %v804
        %v837 = vpop.xlane.xlu0 %836
        %v838 = vsub.f32 %v767, %v807
        %v839 = vsub.f32 %v769, %v809
        %v840 = vsub.f32 %v772, %v811
        %v841 = vsub.f32 %v774, %v813
        %v842 = vsub.f32 %v777, %v815
        %v843 = vsub.f32 %v779, %v817
        %v844 = vsub.f32 %v782, %v819
        %v845 = vsub.f32 %v784, %v821
        %v846 = vsub.f32 %v787, %v823
        %v847 = vsub.f32 %v789, %v825
        %v848 = vsub.f32 %v792, %v827
        %v849 = vsub.f32 %v794, %v829
        %v850 = vsub.f32 %v797, %v831
        %v851 = vsub.f32 %v799, %v833
        %v852 = vsub.f32 %v802, %v835
        %v853 = vsub.f32 %v804, %v837
        %v854 = vmul.f32 %v838, 1.442695
        %v855 = vpow.pop %v854
        %v856 = vmul.f32 %v839, 1.442695
        %v857 = vpow.pop %v856
        %v858 = vmul.f32 %v840, 1.442695
        %v859 = vpow.pop %v858
        %v860 = vmul.f32 %v841, 1.442695
        %v861 = vpow.pop %v860
        %v862 = vmul.f32 %v842, 1.442695
        %v863 = vpow.pop %v862
        %v864 = vmul.f32 %v843, 1.442695
        %v865 = vpow.pop %v864
        %v866 = vmul.f32 %v844, 1.442695
        %v867 = vpow.pop %v866
        %v868 = vmul.f32 %v845, 1.442695
        %v869 = vpow.pop %v868
        %v870 = vmul.f32 %v846, 1.442695
        %v871 = vpow.pop %v870
        %v872 = vmul.f32 %v847, 1.442695
        %v873 = vpow.pop %v872
        %v874 = vmul.f32 %v848, 1.442695
        %v875 = vpow.pop %v874
        %v876 = vmul.f32 %v849, 1.442695
        %v877 = vpow.pop %v876
        %v878 = vmul.f32 %v850, 1.442695
        %v879 = vpow.pop %v878
        %v880 = vmul.f32 %v851, 1.442695
        %v881 = vpow.pop %v880
        %v882 = vmul.f32 %v852, 1.442695
        %v883 = vpow.pop %v882
        %v884 = vmul.f32 %v853, 1.442695
        %v885 = vpow.pop %v884
        %886 = vadd.xlane.f32.xlu0 %v855
        %v887 = vpop.xlane.xlu0 %886
        %888 = vadd.xlane.f32.xlu0 %v857
        %v889 = vpop.xlane.xlu0 %888
        %890 = vadd.xlane.f32.xlu0 %v859
        %v891 = vpop.xlane.xlu0 %890
        %892 = vadd.xlane.f32.xlu0 %v861
        %v893 = vpop.xlane.xlu0 %892
        %894 = vadd.xlane.f32.xlu0 %v863
        %v895 = vpop.xlane.xlu0 %894
        %896 = vadd.xlane.f32.xlu0 %v865
        %v897 = vpop.xlane.xlu0 %896
        %898 = vadd.xlane.f32.xlu0 %v867
        %v899 = vpop.xlane.xlu0 %898
        %900 = vadd.xlane.f32.xlu0 %v869
        %v901 = vpop.xlane.xlu0 %900
        %902 = vadd.xlane.f32.xlu0 %v871
        %v903 = vpop.xlane.xlu0 %902
        %904 = vadd.xlane.f32.xlu0 %v873
        %v905 = vpop.xlane.xlu0 %904
        %906 = vadd.xlane.f32.xlu0 %v875
        %v907 = vpop.xlane.xlu0 %906
        %908 = vadd.xlane.f32.xlu0 %v877
        %v909 = vpop.xlane.xlu0 %908
        %910 = vadd.xlane.f32.xlu0 %v879
        %v911 = vpop.xlane.xlu0 %910
        %912 = vadd.xlane.f32.xlu0 %v881
        %v913 = vpop.xlane.xlu0 %912
        %914 = vadd.xlane.f32.xlu0 %v883
        %v915 = vpop.xlane.xlu0 %914
        %916 = vadd.xlane.f32.xlu0 %v885
        %v917 = vpop.xlane.xlu0 %916
        %v918 = vrcp.pop %v887
        %v919 = vrcp.pop %v889
        %v920 = vrcp.pop %v891
        %v921 = vrcp.pop %v893
        %v922 = vrcp.pop %v895
        %v923 = vrcp.pop %v897
        %v924 = vrcp.pop %v899
        %v925 = vrcp.pop %v901
        %v926 = vrcp.pop %v903
        %v927 = vrcp.pop %v905
        %v928 = vrcp.pop %v907
        %v929 = vrcp.pop %v909
        %v930 = vrcp.pop %v911
        %v931 = vrcp.pop %v913
        %v932 = vrcp.pop %v915
        %v933 = vrcp.pop %v917
        %v934 = vmul.f32 %v855, %v918
        %v935 = vmul.f32 %v857, %v919
        %v936 = vmul.f32 %v859, %v920
        %v937 = vmul.f32 %v861, %v921
        %v938 = vmul.f32 %v863, %v922
        %v939 = vmul.f32 %v865, %v923
        %v940 = vmul.f32 %v867, %v924
        %v941 = vmul.f32 %v869, %v925
        %v942 = vmul.f32 %v871, %v926
        %v943 = vmul.f32 %v873, %v927
        %v944 = vmul.f32 %v875, %v928
        %v945 = vmul.f32 %v877, %v929
        %v946 = vmul.f32 %v879, %v930
        %v947 = vmul.f32 %v881, %v931
        %v948 = vmul.f32 %v883, %v932
        %v949 = vmul.f32 %v885, %v933
        %v950 = vpack.c.bf16 %v935, %v934
        %v951 = vpack.c.bf16 %v937, %v936
        %v952 = vpack.c.bf16 %v939, %v938
        %v953 = vpack.c.bf16 %v941, %v940
        %v954 = vpack.c.bf16 %v943, %v942
        %v955 = vpack.c.bf16 %v945, %v944
        %v956 = vpack.c.bf16 %v947, %v946
        %v957 = vpack.c.bf16 %v949, %v948
        %958 = vmatpush.bf16.msra.mxu0 %v707
        %959 = vmatpush.bf16.msra.mxu0 %v706
        %960 = vmatpush.bf16.msra.mxu0 %v705
        %961 = vmatpush.bf16.msra.mxu0 %v704
        %962 = vmatpush.bf16.msra.mxu0 %v703
        %963 = vmatpush.bf16.msra.mxu0 %v702
        %964 = vmatpush.bf16.msra.mxu0 %v701
        %965 = vmatpush.bf16.msra.mxu0 %v700
        %966 = vmatmul.bf16.gmra.mxu0 %v950
        %v967 = vpop.f32.mrf.mxu0
        %v968 = vadd.f32 0.0, %v967
        %v969 = vpop.f32.mrf.mxu0
        %v970 = vadd.f32 0.0, %v969
        %971 = vmatmul.bf16.gmra.mxu0 %v951
        %v972 = vpop.f32.mrf.mxu0
        %v973 = vadd.f32 0.0, %v972
        %v974 = vpop.f32.mrf.mxu0
        %v975 = vadd.f32 0.0, %v974
        %976 = vmatmul.bf16.gmra.mxu0 %v952
        %v977 = vpop.f32.mrf.mxu0
        %v978 = vadd.f32 0.0, %v977
        %v979 = vpop.f32.mrf.mxu0
        %v980 = vadd.f32 0.0, %v979
        %981 = vmatmul.bf16.gmra.mxu0 %v953
        %v982 = vpop.f32.mrf.mxu0
        %v983 = vadd.f32 0.0, %v982
        %v984 = vpop.f32.mrf.mxu0
        %v985 = vadd.f32 0.0, %v984
        %986 = vmatmul.bf16.gmra.mxu0 %v954
        %v987 = vpop.f32.mrf.mxu0
        %v988 = vadd.f32 0.0, %v987
        %v989 = vpop.f32.mrf.mxu0
        %v990 = vadd.f32 0.0, %v989
        %991 = vmatmul.bf16.gmra.mxu0 %v955
        %v992 = vpop.f32.mrf.mxu0
        %v993 = vadd.f32 0.0, %v992
        %v994 = vpop.f32.mrf.mxu0
        %v995 = vadd.f32 0.0, %v994
        %996 = vmatmul.bf16.gmra.mxu0 %v956
        %v997 = vpop.f32.mrf.mxu0
        %v998 = vadd.f32 0.0, %v997
        %v999 = vpop.f32.mrf.mxu0
        %v1000 = vadd.f32 0.0, %v999
        %1001 = vmatmul.bf16.gmra.mxu0 %v957
        %v1002 = vpop.f32.mrf.mxu0
        %v1003 = vadd.f32 0.0, %v1002
        %v1004 = vpop.f32.mrf.mxu0
        %v1005 = vadd.f32 0.0, %v1004
        %1006 = vdwg.mxu0
        %v1007 = vpack.c.bf16 %v968, %v968
        %v1008 = vpack.c.bf16 %v970, %v970
        %v1009 = vpack.c.bf16 %v973, %v973
        %v1010 = vpack.c.bf16 %v975, %v975
        %v1011 = vpack.c.bf16 %v978, %v978
        %v1012 = vpack.c.bf16 %v980, %v980
        %v1013 = vpack.c.bf16 %v983, %v983
        %v1014 = vpack.c.bf16 %v985, %v985
        %v1015 = vpack.c.bf16 %v988, %v988
        %v1016 = vpack.c.bf16 %v990, %v990
        %v1017 = vpack.c.bf16 %v993, %v993
        %v1018 = vpack.c.bf16 %v995, %v995
        %v1019 = vpack.c.bf16 %v998, %v998
        %v1020 = vpack.c.bf16 %v1000, %v1000
        %v1021 = vpack.c.bf16 %v1003, %v1003
        %v1022 = vpack.c.bf16 %v1005, %v1005
        %vm1023 = vcmask 519168
        %1024 = vst.msk [vmem:[#allocation2] sm:$0xf] %vm1023, %v1007
        %1025 = vst.msk [vmem:[#allocation2 + $0x4] sm:$0xf] %vm1023, %v1008
        %1026 = vst.msk [vmem:[#allocation2 + $0x8] sm:$0xf] %vm1023, %v1009
        %1027 = vst.msk [vmem:[#allocation2 + $0xc] sm:$0xf] %vm1023, %v1010
        %1028 = vst.msk [vmem:[#allocation2 + $0x10] sm:$0xf] %vm1023, %v1011
        %1029 = vst.msk [vmem:[#allocation2 + $0x14] sm:$0xf] %vm1023, %v1012
        %1030 = vst.msk [vmem:[#allocation2 + $0x18] sm:$0xf] %vm1023, %v1013
        %1031 = vst.msk [vmem:[#allocation2 + $0x1c] sm:$0xf] %vm1023, %v1014
        %1032 = vst.msk [vmem:[#allocation2 + $0x20] sm:$0xf] %vm1023, %v1015
        %1033 = vst.msk [vmem:[#allocation2 + $0x24] sm:$0xf] %vm1023, %v1016
        %1034 = vst.msk [vmem:[#allocation2 + $0x28] sm:$0xf] %vm1023, %v1017
        %1035 = vst.msk [vmem:[#allocation2 + $0x2c] sm:$0xf] %vm1023, %v1018
        %1036 = vst.msk [vmem:[#allocation2 + $0x30] sm:$0xf] %vm1023, %v1019
        %1037 = vst.msk [vmem:[#allocation2 + $0x34] sm:$0xf] %vm1023, %v1020
        %1038 = vst.msk [vmem:[#allocation2 + $0x38] sm:$0xf] %vm1023, %v1021
        %1039 = vst.msk [vmem:[#allocation2 + $0x3c] sm:$0xf] %vm1023, %v1022
        %1048 = vrot.lane.b32.xlu0 %v684, 64
        %v1049 = vpop.permute.xlu0 %1048
        %1050 = vrot.lane.b32.xlu0 %v685, 64
        %v1051 = vpop.permute.xlu0 %1050
        %1052 = vrot.lane.b32.xlu0 %v686, 64
        %v1053 = vpop.permute.xlu0 %1052
        %1054 = vrot.lane.b32.xlu0 %v687, 64
        %v1055 = vpop.permute.xlu0 %1054
        %1056 = vrot.lane.b32.xlu0 %v688, 64
        %v1057 = vpop.permute.xlu0 %1056
        %1058 = vrot.lane.b32.xlu0 %v689, 64
        %v1059 = vpop.permute.xlu0 %1058
        %1060 = vrot.lane.b32.xlu0 %v690, 64
        %v1061 = vpop.permute.xlu0 %1060
        %1062 = vrot.lane.b32.xlu0 %v691, 64
        %v1063 = vpop.permute.xlu0 %1062
        %1072 = vrot.lane.b32.xlu0 %v692, 64
        %v1073 = vpop.permute.xlu0 %1072
        %1074 = vrot.lane.b32.xlu0 %v693, 64
        %v1075 = vpop.permute.xlu0 %1074
        %1076 = vrot.lane.b32.xlu0 %v694, 64
        %v1077 = vpop.permute.xlu0 %1076
        %1078 = vrot.lane.b32.xlu0 %v695, 64
        %v1079 = vpop.permute.xlu0 %1078
        %1080 = vrot.lane.b32.xlu0 %v696, 64
        %v1081 = vpop.permute.xlu0 %1080
        %1082 = vrot.lane.b32.xlu0 %v697, 64
        %v1083 = vpop.permute.xlu0 %1082
        %1084 = vrot.lane.b32.xlu0 %v698, 64
        %v1085 = vpop.permute.xlu0 %1084
        %1086 = vrot.lane.b32.xlu0 %v699, 64
        %v1087 = vpop.permute.xlu0 %1086
        %v1089 = vsel %vm708, %v1049, 0
        %v1092 = vsel %vm708, %v1051, 0
        %v1095 = vsel %vm708, %v1053, 0
        %v1098 = vsel %vm708, %v1055, 0
        %v1101 = vsel %vm708, %v1057, 0
        %v1104 = vsel %vm708, %v1059, 0
        %v1107 = vsel %vm708, %v1061, 0
        %v1110 = vsel %vm708, %v1063, 0
        %v1113 = vsel %vm708, %v1073, 0
        %v1116 = vsel %vm708, %v1075, 0
        %v1119 = vsel %vm708, %v1077, 0
        %v1122 = vsel %vm708, %v1079, 0
        %v1125 = vsel %vm708, %v1081, 0
        %v1128 = vsel %vm708, %v1083, 0
        %v1131 = vsel %vm708, %v1085, 0
        %v1134 = vsel %vm708, %v1087, 0
        %1136 = vmatpush.bf16.xpose.msra.mxu0 %v1134
        %1137 = vmatpush.bf16.xpose.msra.mxu0 %v1131
        %1138 = vmatpush.bf16.xpose.msra.mxu0 %v1128
        %1139 = vmatpush.bf16.xpose.msra.mxu0 %v1125
        %1140 = vmatpush.bf16.xpose.msra.mxu0 %v1122
        %1141 = vmatpush.bf16.xpose.msra.mxu0 %v1119
        %1142 = vmatpush.bf16.xpose.msra.mxu0 %v1116
        %1143 = vmatpush.bf16.xpose.msra.mxu0 %v1113
        %1144 = vmatmul.bf16.gmra.mxu0 %v1089
        %v1145 = vpop.f32.mrf.mxu0
        %v1146 = vadd.f32 %v668, %v1145
        %v1147 = vpop.f32.mrf.mxu0
        %v1148 = vadd.f32 %v669, %v1147
        %1149 = vmatmul.bf16.gmra.mxu0 %v1092
        %v1150 = vpop.f32.mrf.mxu0
        %v1151 = vadd.f32 %v670, %v1150
        %v1152 = vpop.f32.mrf.mxu0
        %v1153 = vadd.f32 %v671, %v1152
        %1154 = vmatmul.bf16.gmra.mxu0 %v1095
        %v1155 = vpop.f32.mrf.mxu0
        %v1156 = vadd.f32 %v672, %v1155
        %v1157 = vpop.f32.mrf.mxu0
        %v1158 = vadd.f32 %v673, %v1157
        %1159 = vmatmul.bf16.gmra.mxu0 %v1098
        %v1160 = vpop.f32.mrf.mxu0
        %v1161 = vadd.f32 %v674, %v1160
        %v1162 = vpop.f32.mrf.mxu0
        %v1163 = vadd.f32 %v675, %v1162
        %1164 = vmatmul.bf16.gmra.mxu0 %v1101
        %v1165 = vpop.f32.mrf.mxu0
        %v1166 = vadd.f32 %v676, %v1165
        %v1167 = vpop.f32.mrf.mxu0
        %v1168 = vadd.f32 %v677, %v1167
        %1169 = vmatmul.bf16.gmra.mxu0 %v1104
        %v1170 = vpop.f32.mrf.mxu0
        %v1171 = vadd.f32 %v678, %v1170
        %v1172 = vpop.f32.mrf.mxu0
        %v1173 = vadd.f32 %v679, %v1172
        %1174 = vmatmul.bf16.gmra.mxu0 %v1107
        %v1175 = vpop.f32.mrf.mxu0
        %v1176 = vadd.f32 %v680, %v1175
        %v1177 = vpop.f32.mrf.mxu0
        %v1178 = vadd.f32 %v681, %v1177
        %1179 = vmatmul.bf16.gmra.mxu0 %v1110
        %v1180 = vpop.f32.mrf.mxu0
        %v1181 = vadd.f32 %v682, %v1180
        %v1182 = vpop.f32.mrf.mxu0
        %v1183 = vadd.f32 %v683, %v1182
        %1184 = vdwg.mxu0
        %1185 = vmax.xlane.f32.xlu0 %v1146
        %v1186 = vpop.xlane.xlu0 %1185
        %1187 = vmax.xlane.f32.xlu0 %v1148
        %v1188 = vpop.xlane.xlu0 %1187
        %1189 = vmax.xlane.f32.xlu0 %v1151
        %v1190 = vpop.xlane.xlu0 %1189
        %1191 = vmax.xlane.f32.xlu0 %v1153
        %v1192 = vpop.xlane.xlu0 %1191
        %1193 = vmax.xlane.f32.xlu0 %v1156
        %v1194 = vpop.xlane.xlu0 %1193
        %1195 = vmax.xlane.f32.xlu0 %v1158
        %v1196 = vpop.xlane.xlu0 %1195
        %1197 = vmax.xlane.f32.xlu0 %v1161
        %v1198 = vpop.xlane.xlu0 %1197
        %1199 = vmax.xlane.f32.xlu0 %v1163
        %v1200 = vpop.xlane.xlu0 %1199
        %1201 = vmax.xlane.f32.xlu0 %v1166
        %v1202 = vpop.xlane.xlu0 %1201
        %1203 = vmax.xlane.f32.xlu0 %v1168
        %v1204 = vpop.xlane.xlu0 %1203
        %1205 = vmax.xlane.f32.xlu0 %v1171
        %v1206 = vpop.xlane.xlu0 %1205
        %1207 = vmax.xlane.f32.xlu0 %v1173
        %v1208 = vpop.xlane.xlu0 %1207
        %1209 = vmax.xlane.f32.xlu0 %v1176
        %v1210 = vpop.xlane.xlu0 %1209
        %1211 = vmax.xlane.f32.xlu0 %v1178
        %v1212 = vpop.xlane.xlu0 %1211
        %1213 = vmax.xlane.f32.xlu0 %v1181
        %v1214 = vpop.xlane.xlu0 %1213
        %1215 = vmax.xlane.f32.xlu0 %v1183
        %v1216 = vpop.xlane.xlu0 %1215
        %v1217 = vsub.f32 %v1146, %v1186
        %v1218 = vsub.f32 %v1148, %v1188
        %v1219 = vsub.f32 %v1151, %v1190
        %v1220 = vsub.f32 %v1153, %v1192
        %v1221 = vsub.f32 %v1156, %v1194
        %v1222 = vsub.f32 %v1158, %v1196
        %v1223 = vsub.f32 %v1161, %v1198
        %v1224 = vsub.f32 %v1163, %v1200
        %v1225 = vsub.f32 %v1166, %v1202
        %v1226 = vsub.f32 %v1168, %v1204
        %v1227 = vsub.f32 %v1171, %v1206
        %v1228 = vsub.f32 %v1173, %v1208
        %v1229 = vsub.f32 %v1176, %v1210
        %v1230 = vsub.f32 %v1178, %v1212
        %v1231 = vsub.f32 %v1181, %v1214
        %v1232 = vsub.f32 %v1183, %v1216
        %v1233 = vmul.f32 %v1217, 1.442695
        %v1234 = vpow.pop %v1233
        %v1235 = vmul.f32 %v1218, 1.442695
        %v1236 = vpow.pop %v1235
        %v1237 = vmul.f32 %v1219, 1.442695
        %v1238 = vpow.pop %v1237
        %v1239 = vmul.f32 %v1220, 1.442695
        %v1240 = vpow.pop %v1239
        %v1241 = vmul.f32 %v1221, 1.442695
        %v1242 = vpow.pop %v1241
        %v1243 = vmul.f32 %v1222, 1.442695
        %v1244 = vpow.pop %v1243
        %v1245 = vmul.f32 %v1223, 1.442695
        %v1246 = vpow.pop %v1245
        %v1247 = vmul.f32 %v1224, 1.442695
        %v1248 = vpow.pop %v1247
        %v1249 = vmul.f32 %v1225, 1.442695
        %v1250 = vpow.pop %v1249
        %v1251 = vmul.f32 %v1226, 1.442695
        %v1252 = vpow.pop %v1251
        %v1253 = vmul.f32 %v1227, 1.442695
        %v1254 = vpow.pop %v1253
        %v1255 = vmul.f32 %v1228, 1.442695
        %v1256 = vpow.pop %v1255
        %v1257 = vmul.f32 %v1229, 1.442695
        %v1258 = vpow.pop %v1257
        %v1259 = vmul.f32 %v1230, 1.442695
        %v1260 = vpow.pop %v1259
        %v1261 = vmul.f32 %v1231, 1.442695
        %v1262 = vpow.pop %v1261
        %v1263 = vmul.f32 %v1232, 1.442695
        %v1264 = vpow.pop %v1263
        %1265 = vadd.xlane.f32.xlu0 %v1234
        %v1266 = vpop.xlane.xlu0 %1265
        %1267 = vadd.xlane.f32.xlu0 %v1236
        %v1268 = vpop.xlane.xlu0 %1267
        %1269 = vadd.xlane.f32.xlu0 %v1238
        %v1270 = vpop.xlane.xlu0 %1269
        %1271 = vadd.xlane.f32.xlu0 %v1240
        %v1272 = vpop.xlane.xlu0 %1271
        %1273 = vadd.xlane.f32.xlu0 %v1242
        %v1274 = vpop.xlane.xlu0 %1273
        %1275 = vadd.xlane.f32.xlu0 %v1244
        %v1276 = vpop.xlane.xlu0 %1275
        %1277 = vadd.xlane.f32.xlu0 %v1246
        %v1278 = vpop.xlane.xlu0 %1277
        %1279 = vadd.xlane.f32.xlu0 %v1248
        %v1280 = vpop.xlane.xlu0 %1279
        %1281 = vadd.xlane.f32.xlu0 %v1250
        %v1282 = vpop.xlane.xlu0 %1281
        %1283 = vadd.xlane.f32.xlu0 %v1252
        %v1284 = vpop.xlane.xlu0 %1283
        %1285 = vadd.xlane.f32.xlu0 %v1254
        %v1286 = vpop.xlane.xlu0 %1285
        %1287 = vadd.xlane.f32.xlu0 %v1256
        %v1288 = vpop.xlane.xlu0 %1287
        %1289 = vadd.xlane.f32.xlu0 %v1258
        %v1290 = vpop.xlane.xlu0 %1289
        %1291 = vadd.xlane.f32.xlu0 %v1260
        %v1292 = vpop.xlane.xlu0 %1291
        %1293 = vadd.xlane.f32.xlu0 %v1262
        %v1294 = vpop.xlane.xlu0 %1293
        %1295 = vadd.xlane.f32.xlu0 %v1264
        %v1296 = vpop.xlane.xlu0 %1295
        %v1297 = vrcp.pop %v1266
        %v1298 = vrcp.pop %v1268
        %v1299 = vrcp.pop %v1270
        %v1300 = vrcp.pop %v1272
        %v1301 = vrcp.pop %v1274
        %v1302 = vrcp.pop %v1276
        %v1303 = vrcp.pop %v1278
        %v1304 = vrcp.pop %v1280
        %v1305 = vrcp.pop %v1282
        %v1306 = vrcp.pop %v1284
        %v1307 = vrcp.pop %v1286
        %v1308 = vrcp.pop %v1288
        %v1309 = vrcp.pop %v1290
        %v1310 = vrcp.pop %v1292
        %v1311 = vrcp.pop %v1294
        %v1312 = vrcp.pop %v1296
        %v1313 = vmul.f32 %v1234, %v1297
        %v1314 = vmul.f32 %v1236, %v1298
        %v1315 = vmul.f32 %v1238, %v1299
        %v1316 = vmul.f32 %v1240, %v1300
        %v1317 = vmul.f32 %v1242, %v1301
        %v1318 = vmul.f32 %v1244, %v1302
        %v1319 = vmul.f32 %v1246, %v1303
        %v1320 = vmul.f32 %v1248, %v1304
        %v1321 = vmul.f32 %v1250, %v1305
        %v1322 = vmul.f32 %v1252, %v1306
        %v1323 = vmul.f32 %v1254, %v1307
        %v1324 = vmul.f32 %v1256, %v1308
        %v1325 = vmul.f32 %v1258, %v1309
        %v1326 = vmul.f32 %v1260, %v1310
        %v1327 = vmul.f32 %v1262, %v1311
        %v1328 = vmul.f32 %v1264, %v1312
        %v1329 = vpack.c.bf16 %v1314, %v1313
        %v1330 = vpack.c.bf16 %v1316, %v1315
        %v1331 = vpack.c.bf16 %v1318, %v1317
        %v1332 = vpack.c.bf16 %v1320, %v1319
        %v1333 = vpack.c.bf16 %v1322, %v1321
        %v1334 = vpack.c.bf16 %v1324, %v1323
        %v1335 = vpack.c.bf16 %v1326, %v1325
        %v1336 = vpack.c.bf16 %v1328, %v1327
        %1345 = vrot.lane.b32.xlu0 %v700, 64
        %v1346 = vpop.permute.xlu0 %1345
        %1347 = vrot.lane.b32.xlu0 %v701, 64
        %v1348 = vpop.permute.xlu0 %1347
        %1349 = vrot.lane.b32.xlu0 %v702, 64
        %v1350 = vpop.permute.xlu0 %1349
        %1351 = vrot.lane.b32.xlu0 %v703, 64
        %v1352 = vpop.permute.xlu0 %1351
        %1353 = vrot.lane.b32.xlu0 %v704, 64
        %v1354 = vpop.permute.xlu0 %1353
        %1355 = vrot.lane.b32.xlu0 %v705, 64
        %v1356 = vpop.permute.xlu0 %1355
        %1357 = vrot.lane.b32.xlu0 %v706, 64
        %v1358 = vpop.permute.xlu0 %1357
        %1359 = vrot.lane.b32.xlu0 %v707, 64
        %v1360 = vpop.permute.xlu0 %1359
        %1369 = vmatpush.bf16.msra.mxu0 %v1360
        %1370 = vmatpush.bf16.msra.mxu0 %v1358
        %1371 = vmatpush.bf16.msra.mxu0 %v1356
        %1372 = vmatpush.bf16.msra.mxu0 %v1354
        %1373 = vmatpush.bf16.msra.mxu0 %v1352
        %1374 = vmatpush.bf16.msra.mxu0 %v1350
        %1375 = vmatpush.bf16.msra.mxu0 %v1348
        %1376 = vmatpush.bf16.msra.mxu0 %v1346
        %1377 = vmatmul.bf16.gmra.mxu0 %v1329
        %v1378 = vpop.f32.mrf.mxu0
        %v1379 = vadd.f32 0.0, %v1378
        %v1380 = vpop.f32.mrf.mxu0
        %v1381 = vadd.f32 0.0, %v1380
        %1382 = vmatmul.bf16.gmra.mxu0 %v1330
        %v1383 = vpop.f32.mrf.mxu0
        %v1384 = vadd.f32 0.0, %v1383
        %v1385 = vpop.f32.mrf.mxu0
        %v1386 = vadd.f32 0.0, %v1385
        %1387 = vmatmul.bf16.gmra.mxu0 %v1331
        %v1388 = vpop.f32.mrf.mxu0
        %v1389 = vadd.f32 0.0, %v1388
        %v1390 = vpop.f32.mrf.mxu0
        %v1391 = vadd.f32 0.0, %v1390
        %1392 = vmatmul.bf16.gmra.mxu0 %v1332
        %v1393 = vpop.f32.mrf.mxu0
        %v1394 = vadd.f32 0.0, %v1393
        %v1395 = vpop.f32.mrf.mxu0
        %v1396 = vadd.f32 0.0, %v1395
        %1397 = vmatmul.bf16.gmra.mxu0 %v1333
        %v1398 = vpop.f32.mrf.mxu0
        %v1399 = vadd.f32 0.0, %v1398
        %v1400 = vpop.f32.mrf.mxu0
        %v1401 = vadd.f32 0.0, %v1400
        %1402 = vmatmul.bf16.gmra.mxu0 %v1334
        %v1403 = vpop.f32.mrf.mxu0
        %v1404 = vadd.f32 0.0, %v1403
        %v1405 = vpop.f32.mrf.mxu0
        %v1406 = vadd.f32 0.0, %v1405
        %1407 = vmatmul.bf16.gmra.mxu0 %v1335
        %v1408 = vpop.f32.mrf.mxu0
        %v1409 = vadd.f32 0.0, %v1408
        %v1410 = vpop.f32.mrf.mxu0
        %v1411 = vadd.f32 0.0, %v1410
        %1412 = vmatmul.bf16.gmra.mxu0 %v1336
        %v1413 = vpop.f32.mrf.mxu0
        %v1414 = vadd.f32 0.0, %v1413
        %v1415 = vpop.f32.mrf.mxu0
        %v1416 = vadd.f32 0.0, %v1415
        %1417 = vdwg.mxu0
        %v1418 = vpack.c.bf16 %v1379, %v1379
        %v1419 = vpack.c.bf16 %v1381, %v1381
        %v1420 = vpack.c.bf16 %v1384, %v1384
        %v1421 = vpack.c.bf16 %v1386, %v1386
        %v1422 = vpack.c.bf16 %v1389, %v1389
        %v1423 = vpack.c.bf16 %v1391, %v1391
        %v1424 = vpack.c.bf16 %v1394, %v1394
        %v1425 = vpack.c.bf16 %v1396, %v1396
        %v1426 = vpack.c.bf16 %v1399, %v1399
        %v1427 = vpack.c.bf16 %v1401, %v1401
        %v1428 = vpack.c.bf16 %v1404, %v1404
        %v1429 = vpack.c.bf16 %v1406, %v1406
        %v1430 = vpack.c.bf16 %v1409, %v1409
        %v1431 = vpack.c.bf16 %v1411, %v1411
        %v1432 = vpack.c.bf16 %v1414, %v1414
        %v1433 = vpack.c.bf16 %v1416, %v1416
        %1450 = vrot.lane.b32.xlu0 %v1418, 64
        %v1451 = vpop.permute.xlu0 %1450
        %1452 = vrot.lane.b32.xlu0 %v1419, 64
        %v1453 = vpop.permute.xlu0 %1452
        %1454 = vrot.lane.b32.xlu0 %v1420, 64
        %v1455 = vpop.permute.xlu0 %1454
        %1456 = vrot.lane.b32.xlu0 %v1421, 64
        %v1457 = vpop.permute.xlu0 %1456
        %1458 = vrot.lane.b32.xlu0 %v1422, 64
        %v1459 = vpop.permute.xlu0 %1458
        %1460 = vrot.lane.b32.xlu0 %v1423, 64
        %v1461 = vpop.permute.xlu0 %1460
        %1462 = vrot.lane.b32.xlu0 %v1424, 64
        %v1463 = vpop.permute.xlu0 %1462
        %1464 = vrot.lane.b32.xlu0 %v1425, 64
        %v1465 = vpop.permute.xlu0 %1464
        %1466 = vrot.lane.b32.xlu0 %v1426, 64
        %v1467 = vpop.permute.xlu0 %1466
        %1468 = vrot.lane.b32.xlu0 %v1427, 64
        %v1469 = vpop.permute.xlu0 %1468
        %1470 = vrot.lane.b32.xlu0 %v1428, 64
        %v1471 = vpop.permute.xlu0 %1470
        %1472 = vrot.lane.b32.xlu0 %v1429, 64
        %v1473 = vpop.permute.xlu0 %1472
        %1474 = vrot.lane.b32.xlu0 %v1430, 64
        %v1475 = vpop.permute.xlu0 %1474
        %1476 = vrot.lane.b32.xlu0 %v1431, 64
        %v1477 = vpop.permute.xlu0 %1476
        %1478 = vrot.lane.b32.xlu0 %v1432, 64
        %v1479 = vpop.permute.xlu0 %1478
        %1480 = vrot.lane.b32.xlu0 %v1433, 64
        %v1481 = vpop.permute.xlu0 %1480
        %vm1498 = vcmask 1043968
        %1499 = vst.msk [vmem:[#allocation2] sm:$0xf] %vm1498, %v1451
        %1500 = vst.msk [vmem:[#allocation2 + $0x4] sm:$0xf] %vm1498, %v1453
        %1501 = vst.msk [vmem:[#allocation2 + $0x8] sm:$0xf] %vm1498, %v1455
        %1502 = vst.msk [vmem:[#allocation2 + $0xc] sm:$0xf] %vm1498, %v1457
        %1503 = vst.msk [vmem:[#allocation2 + $0x10] sm:$0xf] %vm1498, %v1459
        %1504 = vst.msk [vmem:[#allocation2 + $0x14] sm:$0xf] %vm1498, %v1461
        %1505 = vst.msk [vmem:[#allocation2 + $0x18] sm:$0xf] %vm1498, %v1463
        %1506 = vst.msk [vmem:[#allocation2 + $0x1c] sm:$0xf] %vm1498, %v1465
        %1507 = vst.msk [vmem:[#allocation2 + $0x20] sm:$0xf] %vm1498, %v1467
        %1508 = vst.msk [vmem:[#allocation2 + $0x24] sm:$0xf] %vm1498, %v1469
        %1509 = vst.msk [vmem:[#allocation2 + $0x28] sm:$0xf] %vm1498, %v1471
        %1510 = vst.msk [vmem:[#allocation2 + $0x2c] sm:$0xf] %vm1498, %v1473
        %1511 = vst.msk [vmem:[#allocation2 + $0x30] sm:$0xf] %vm1498, %v1475
        %1512 = vst.msk [vmem:[#allocation2 + $0x34] sm:$0xf] %vm1498, %v1477
        %1513 = vst.msk [vmem:[#allocation2 + $0x38] sm:$0xf] %vm1498, %v1479
        %1514 = vst.msk [vmem:[#allocation2 + $0x3c] sm:$0xf] %vm1498, %v1481
        %v1515 = vld [vmem:[#allocation2] sm:$0xf]
        %v1516 = vld [vmem:[#allocation2 + $0x4] sm:$0xf]
        %v1517 = vld [vmem:[#allocation2 + $0x8] sm:$0xf]
        %v1518 = vld [vmem:[#allocation2 + $0xc] sm:$0xf]
        %v1519 = vld [vmem:[#allocation2 + $0x10] sm:$0xf]
        %v1520 = vld [vmem:[#allocation2 + $0x14] sm:$0xf]
        %v1521 = vld [vmem:[#allocation2 + $0x18] sm:$0xf]
        %v1522 = vld [vmem:[#allocation2 + $0x1c] sm:$0xf]
        %v1523 = vld [vmem:[#allocation2 + $0x20] sm:$0xf]
        %v1524 = vld [vmem:[#allocation2 + $0x24] sm:$0xf]
        %v1525 = vld [vmem:[#allocation2 + $0x28] sm:$0xf]
        %v1526 = vld [vmem:[#allocation2 + $0x2c] sm:$0xf]
        %v1527 = vld [vmem:[#allocation2 + $0x30] sm:$0xf]
        %v1528 = vld [vmem:[#allocation2 + $0x34] sm:$0xf]
        %v1529 = vld [vmem:[#allocation2 + $0x38] sm:$0xf]
        %v1530 = vld [vmem:[#allocation2 + $0x3c] sm:$0xf]
        %v1531 = vld [vmem:[#allocation8] sm:$0xf]
        %v1532 = vld [vmem:[#allocation8 + $0x4] sm:$0xf]
        %v1533 = vld [vmem:[#allocation8 + $0x8] sm:$0xf]
        %v1534 = vld [vmem:[#allocation8 + $0xc] sm:$0xf]
        %v1535 = vld [vmem:[#allocation8 + $0x10] sm:$0xf]
        %v1536 = vld [vmem:[#allocation8 + $0x14] sm:$0xf]
        %v1537 = vld [vmem:[#allocation8 + $0x18] sm:$0xf]
        %v1538 = vld [vmem:[#allocation8 + $0x1c] sm:$0xf]
        %v1539 = vld [vmem:[#allocation8 + $0x20] sm:$0xf]
        %v1540 = vld [vmem:[#allocation8 + $0x24] sm:$0xf]
        %v1541 = vld [vmem:[#allocation8 + $0x28] sm:$0xf]
        %v1542 = vld [vmem:[#allocation8 + $0x2c] sm:$0xf]
        %v1543 = vld [vmem:[#allocation8 + $0x30] sm:$0xf]
        %v1544 = vld [vmem:[#allocation8 + $0x34] sm:$0xf]
        %v1545 = vld [vmem:[#allocation8 + $0x38] sm:$0xf]
        %v1546 = vld [vmem:[#allocation8 + $0x3c] sm:$0xf]
        %v1547 = vld [vmem:[%s3] sm:$0x1]
        %v1549 = vperm.slane %v1547, 0
        %v1567 = vunpack.c.l.b16 %v1515
        %v1568 = vunpack.c.l.b16 %v1516
        %v1569 = vunpack.c.l.b16 %v1517
        %v1570 = vunpack.c.l.b16 %v1518
        %v1571 = vunpack.c.l.b16 %v1519
        %v1572 = vunpack.c.l.b16 %v1520
        %v1573 = vunpack.c.l.b16 %v1521
        %v1574 = vunpack.c.l.b16 %v1522
        %v1575 = vunpack.c.l.b16 %v1523
        %v1576 = vunpack.c.l.b16 %v1524
        %v1577 = vunpack.c.l.b16 %v1525
        %v1578 = vunpack.c.l.b16 %v1526
        %v1579 = vunpack.c.l.b16 %v1527
        %v1580 = vunpack.c.l.b16 %v1528
        %v1581 = vunpack.c.l.b16 %v1529
        %v1582 = vunpack.c.l.b16 %v1530
        %v1583 = vpack.c.b16 %v1568, %v1567
        %v1584 = vpack.c.b16 %v1570, %v1569
        %v1585 = vpack.c.b16 %v1572, %v1571
        %v1586 = vpack.c.b16 %v1574, %v1573
        %v1587 = vpack.c.b16 %v1576, %v1575
        %v1588 = vpack.c.b16 %v1578, %v1577
        %v1589 = vpack.c.b16 %v1580, %v1579
        %v1590 = vpack.c.b16 %v1582, %v1581
        %v1615 = vunpack.c.l.b16 %v1531
        %v1616 = vunpack.c.l.b16 %v1532
        %v1617 = vunpack.c.l.b16 %v1533
        %v1618 = vunpack.c.l.b16 %v1534
        %v1619 = vunpack.c.l.b16 %v1535
        %v1620 = vunpack.c.l.b16 %v1536
        %v1621 = vunpack.c.l.b16 %v1537
        %v1622 = vunpack.c.l.b16 %v1538
        %v1623 = vunpack.c.l.b16 %v1539
        %v1624 = vunpack.c.l.b16 %v1540
        %v1625 = vunpack.c.l.b16 %v1541
        %v1626 = vunpack.c.l.b16 %v1542
        %v1627 = vunpack.c.l.b16 %v1543
        %v1628 = vunpack.c.l.b16 %v1544
        %v1629 = vunpack.c.l.b16 %v1545
        %v1630 = vunpack.c.l.b16 %v1546
        %v1631 = vpack.c.b16 %v1616, %v1615
        %v1632 = vpack.c.b16 %v1618, %v1617
        %v1633 = vpack.c.b16 %v1620, %v1619
        %v1634 = vpack.c.b16 %v1622, %v1621
        %v1635 = vpack.c.b16 %v1624, %v1623
        %v1636 = vpack.c.b16 %v1626, %v1625
        %v1637 = vpack.c.b16 %v1628, %v1627
        %v1638 = vpack.c.b16 %v1630, %v1629
        %1647 = vmatpush.bf16.msra.mxu0 %v1638
        %1648 = vmatpush.bf16.msra.mxu0 %v1637
        %1649 = vmatpush.bf16.msra.mxu0 %v1636
        %1650 = vmatpush.bf16.msra.mxu0 %v1635
        %1651 = vmatpush.bf16.msra.mxu0 %v1634
        %1652 = vmatpush.bf16.msra.mxu0 %v1633
        %1653 = vmatpush.bf16.msra.mxu0 %v1632
        %1654 = vmatpush.bf16.msra.mxu0 %v1631
        %1655 = vmatmul.bf16.gmra.mxu0 %v1583
        %v1656 = vpop.f32.mrf.mxu0
        %v1657 = vadd.f32 %v1549, %v1656
        %v1658 = vpop.f32.mrf.mxu0
        %v1659 = vadd.f32 %v1549, %v1658
        %1660 = vmatmul.bf16.gmra.mxu0 %v1584
        %v1661 = vpop.f32.mrf.mxu0
        %v1662 = vadd.f32 %v1549, %v1661
        %v1663 = vpop.f32.mrf.mxu0
        %v1664 = vadd.f32 %v1549, %v1663
        %1665 = vmatmul.bf16.gmra.mxu0 %v1585
        %v1666 = vpop.f32.mrf.mxu0
        %v1667 = vadd.f32 %v1549, %v1666
        %v1668 = vpop.f32.mrf.mxu0
        %v1669 = vadd.f32 %v1549, %v1668
        %1670 = vmatmul.bf16.gmra.mxu0 %v1586
        %v1671 = vpop.f32.mrf.mxu0
        %v1672 = vadd.f32 %v1549, %v1671
        %v1673 = vpop.f32.mrf.mxu0
        %v1674 = vadd.f32 %v1549, %v1673
        %1675 = vmatmul.bf16.gmra.mxu0 %v1587
        %v1676 = vpop.f32.mrf.mxu0
        %v1677 = vadd.f32 %v1549, %v1676
        %v1678 = vpop.f32.mrf.mxu0
        %v1679 = vadd.f32 %v1549, %v1678
        %1680 = vmatmul.bf16.gmra.mxu0 %v1588
        %v1681 = vpop.f32.mrf.mxu0
        %v1682 = vadd.f32 %v1549, %v1681
        %v1683 = vpop.f32.mrf.mxu0
        %v1684 = vadd.f32 %v1549, %v1683
        %1685 = vmatmul.bf16.gmra.mxu0 %v1589
        %v1686 = vpop.f32.mrf.mxu0
        %v1687 = vadd.f32 %v1549, %v1686
        %v1688 = vpop.f32.mrf.mxu0
        %v1689 = vadd.f32 %v1549, %v1688
        %1690 = vmatmul.bf16.gmra.mxu0 %v1590
        %v1691 = vpop.f32.mrf.mxu0
        %v1692 = vadd.f32 %v1549, %v1691
        %v1693 = vpop.f32.mrf.mxu0
        %v1694 = vadd.f32 %v1549, %v1693
        %1695 = vdwg.mxu0
        %1696 = vst [vmem:[%s294] sm:$0xff] %v1657
        %1697 = vst [vmem:[%s294 + $0x8] sm:$0xff] %v1659
        %1698 = vst [vmem:[%s294 + $0x10] sm:$0xff] %v1662
        %1699 = vst [vmem:[%s294 + $0x18] sm:$0xff] %v1664
        %1700 = vst [vmem:[%s294 + $0x20] sm:$0xff] %v1667
        %1701 = vst [vmem:[%s294 + $0x28] sm:$0xff] %v1669
        %1702 = vst [vmem:[%s294 + $0x30] sm:$0xff] %v1672
        %1703 = vst [vmem:[%s294 + $0x38] sm:$0xff] %v1674
        %1704 = vst [vmem:[%s294 + $0x40] sm:$0xff] %v1677
        %1705 = vst [vmem:[%s294 + $0x48] sm:$0xff] %v1679
        %1706 = vst [vmem:[%s294 + $0x50] sm:$0xff] %v1682
        %1707 = vst [vmem:[%s294 + $0x58] sm:$0xff] %v1684
        %1708 = vst [vmem:[%s294 + $0x60] sm:$0xff] %v1687
        %1709 = vst [vmem:[%s294 + $0x68] sm:$0xff] %v1689
        %1710 = vst [vmem:[%s294 + $0x70] sm:$0xff] %v1692
        %1711 = vst [vmem:[%s294 + $0x78] sm:$0xff] %v1694
        %s1712 = sand.u32 %s142, 1
        %s1713 = scalar_lea.sflag [#allocation5], %s1712
        %s1714 = sand.u32 %s142, 1
        %s1715 = smul.addr %s1714, 128
        %s1716 = scalar_lea.vmem [#allocation11], %s1715
        // Predicated region
        $region57: #{tpu_custom_call.1} parent=39 // pred_check
          %p1717 = pneg %p152
        $region58: #{tpu_custom_call.1} parent=39 // pred_check_branch
          %1719 = sbr.rel (%p1717) target = $region60
        $region59: #{tpu_custom_call.1} parent=39 // pred_region
          %s1720 = smul.u32 16, %s24
          %1722 = vsyncadd %s1713, 0
          %s1723 = smul.addr %s1720, 8
          %s1724 = scalar_lea.hbm %s5, %s1723
          %s1725 = sshll.u32 %s1716, 4
          %s1726 = int_to_ptr.vmem [resolvable:$true] %s1725
          %s1727 = sshll.u32 %s1724, 4
          %s1728 = int_to_ptr.hbm [resolvable:$true] %s1727
          %1733 = dma.vmem_to_hbm [thread:$0]  %s1726, 2048, %s1728, %s1713, 128, 128, 8
        $region60: #{tpu_custom_call.1} parent=39 // pred_fallthru
          _
      $region40: #{tpu_custom_call.1} parent=5 // pred_fallthru
        _
      %p1734 = scmp.le.s32.totalorder 2, %s19
      // Predicated region
      $region61: #{tpu_custom_call.1} parent=5 // pred_check
        %p1735 = pneg %p1734
      $region62: #{tpu_custom_call.1} parent=5 // pred_check_branch
        %1737 = sbr.rel (%p1735) target = $region64
      $region63: #{tpu_custom_call.1} parent=5 // pred_region
        %s1738 = ssub.s32 %s19, 2
        // Predicated region
        $region65: #{tpu_custom_call.1} parent=63 // pred_check
          %p1739 = pneg %p158
        $region66: #{tpu_custom_call.1} parent=63 // pred_check_branch
          %1741 = sbr.rel (%p1739) target = $region68
        $region67: #{tpu_custom_call.1} parent=63 // pred_region
          %s1742 = sand.u32 %s143, 1
          %s1743 = scalar_lea.sflag [#allocation5], %s1742
          %s1744 = sand.u32 %s143, 1
          %s1745 = smul.addr %s1744, 128
          %s1746 = scalar_lea.vmem [#allocation11], %s1745
          %1748 = dma.done %s1743, 2048
        $region68: #{tpu_custom_call.1} parent=63 // pred_fallthru
          _
      $region64: #{tpu_custom_call.1} parent=5 // pred_fallthru
        _
    $region6: #{tpu_custom_call.1} parent=1 // loop_footer
      %s23 = sadd.s32 1, %s19
    $region7: #{tpu_custom_call.1} parent=1 // loop_footer_branch
      %18 = sbr.rel target = $region3
    $region8: #{tpu_custom_call.1} parent=1 // loop_exit
      _
    %1749 = vsyncpa [#allocation4], 1
    %s1750 = scalar_lea.sflag [#allocation4], 1
    %1751 = vsyncpa %s1750, 1
    %1752 = vsyncpa [#allocation7], 1
    %1753 = vsyncpa [#allocation10], 1
    %1754 = vsyncpa [#allocation5], 1
    %s1755 = scalar_lea.sflag [#allocation5], 1
    %1756 = vsyncpa %s1755, 1

</llo_original>
